<compile_context>
chip_gen: v7x
topology: tpu7x:2x2x1
jax: 0.10.0
libtpu: 0.0.40
codegen_flags: <defaults>
</compile_context>

<pallas_src>
import functools

import jax
import jax.numpy as jnp
from jax.experimental import pallas as pl
from jax.experimental.pallas import tpu as pltpu

_HIDDEN = 128
_LANE_PAD = 128   # fc3 weight padded (once, at prepare time) to lane-dense width


def _round_up(x, m):
    return ((x + m - 1) // m) * m


def _default_block_m(batch):
    """128 fills v5e's 4x128^2 MXU; v6e/v7x have 256-wide MXUs, so use 256-row
    tiles once the batch is large enough to be MXU-bound rather than
    overhead-bound."""
    try:
        kind = jax.devices()[0].device_kind.lower()
    except Exception:
        kind = ""
    narrow_mxu = ("v5 lite" in kind) or ("v5e" in kind) or ("v5litepod" in kind)
    if (not narrow_mxu) and batch >= 512:
        return 256
    return 128


def _policy_mlp_kernel(x_ref, w1_ref, b1_ref, w2_ref, b2_ref, w3_ref, b3_ref,
                       o_ref):
    # x: [bm, d_in] f32; w1 f32; w2/w3 bf16; biases f32; out: [bm, n_actions] f32.
    n_actions = o_ref.shape[-1]

    # fc1 in f32: K = input_dims (8) is negligible on the MXU, so f32 is free,
    # removes any state cast, and matches the PyTorch f32 reference exactly.
    h1 = jnp.dot(x_ref[...], w1_ref[...],
                 preferred_element_type=jnp.float32) + b1_ref[...]
    h1 = jnp.maximum(h1, 0.0)                                   # ReLU (VPU)

    h2 = jnp.dot(h1.astype(jnp.bfloat16), w2_ref[...],
                 preferred_element_type=jnp.float32) + b2_ref[...]
    h2 = jnp.maximum(h2, 0.0)                                   # ReLU (VPU)

    # fc3: lane-dense 128-wide matmul against the pre-padded (zero-filled)
    # weight, then slice the real n_actions columns before the tiny store.
    logits = jnp.dot(h2.astype(jnp.bfloat16), w3_ref[...],
                     preferred_element_type=jnp.float32)
    o_ref[...] = logits[:, :n_actions] + b3_ref[...]


@functools.partial(jax.jit, static_argnames=("block_m", "buffered"))
def policy_forward(state, w1, b1, w2, b2, w3p, b3, *, block_m=None,
                   buffered=True):
    """state: [B, input_dims] f32.  Weights/biases must come from
    prepare_policy_params (bf16 fc2/fc3, fc3 padded to 128 lanes), so this
    wrapper does no per-call casting or padding.  Returns [B, n_actions] f32."""
    B, d_in = state.shape
    hidden = w1.shape[1]
    n_actions = b3.shape[-1]
    n_pad = w3p.shape[1]

    bm_target = block_m if block_m is not None else _default_block_m(B)
    bm = min(bm_target, _round_up(B, 8))       # f32 state tile: 8-row alignment
    b_pad = _round_up(B, bm)
    if b_pad != B:                              # only pad when there is a remainder
        state = jnp.pad(state, ((0, b_pad - B), (0, 0)))

    grid = (b_pad // bm,)

    def resident(shape):
        # Same block index every grid step -> resident weight; single-buffered
        # (no double-buffer VMEM or redundant prefetch bookkeeping).
        if buffered:
            return pl.BlockSpec(shape, lambda i: (0, 0),
                                pipeline_mode=pl.Buffered(1))
        return pl.BlockSpec(shape, lambda i: (0, 0))

    flops = 2 * b_pad * (d_in * hidden + hidden * hidden + hidden * n_pad)
    bytes_accessed = (b_pad * d_in * 4 + w1.size * 4 + b1.size * 4
                      + w2.size * 2 + b2.size * 4 + w3p.size * 2 + b3.size * 4
                      + b_pad * n_actions * 4)

    out = pl.pallas_call(
        _policy_mlp_kernel,
        out_shape=jax.ShapeDtypeStruct((b_pad, n_actions), jnp.float32),
        grid=grid,
        in_specs=[
            pl.BlockSpec((bm, d_in), lambda i: (i, 0)),   # state tile (f32)
            resident((d_in, hidden)),                     # w1 (f32)
            resident((1, hidden)),                        # b1
            resident((hidden, hidden)),                   # w2 (bf16)
            resident((1, hidden)),                        # b2
            resident((hidden, n_pad)),                    # w3 (bf16, padded lanes)
            resident((1, n_actions)),                     # b3
        ],
        out_specs=pl.BlockSpec((bm, n_actions), lambda i: (i, 0)),
        compiler_params=pltpu.CompilerParams(
            dimension_semantics=("parallel",),
            vmem_limit_bytes=4 << 20),
        cost_estimate=pl.CostEstimate(flops=flops, transcendentals=0,
                                      bytes_accessed=bytes_accessed),
    )(state, w1, b1, w2, b2, w3p, b3)

    return out if b_pad == B else out[:B]


def init_policy_params(key, input_dims, n_actions, hidden=_HIDDEN):
    """PyTorch nn.Linear default init: U(-1/sqrt(fan_in), 1/sqrt(fan_in)).
    Weights stored as [in, out] (transposed vs. PyTorch); biases as [1, out]."""
    keys = jax.random.split(key, 6)

    def linear(kw, kb, fan_in, fan_out):
        bound = 1.0 / jnp.sqrt(float(fan_in))
        w = jax.random.uniform(kw, (fan_in, fan_out), jnp.float32,
                               minval=-bound, maxval=bound)
        b = jax.random.uniform(kb, (1, fan_out), jnp.float32,
                               minval=-bound, maxval=bound)
        return w, b

    w1, b1 = linear(keys[0], keys[1], input_dims, hidden)
    w2, b2 = linear(keys[2], keys[3], hidden, hidden)
    w3, b3 = linear(keys[4], keys[5], hidden, n_actions)
    return w1, b1, w2, b2, w3, b3


def prepare_policy_params(w1, b1, w2, b2, w3, b3, lane_pad=_LANE_PAD):
    """One-time (per weight update) preparation, hoisted out of the forward path:
      * fc2/fc3 weights cast to bf16 for the MXU (fc1 stays f32: its K dim is
        the tiny input_dims, so f32 is free and matches PyTorch exactly).
      * fc3 weight zero-padded to `lane_pad` output lanes so the final matmul
        is lane-dense; the padded (zero) columns are sliced off in-kernel."""
    hidden, n_actions = w3.shape
    w3p = jnp.zeros((hidden, lane_pad), jnp.bfloat16)
    w3p = w3p.at[:, :n_actions].set(w3.astype(jnp.bfloat16))
    return (jnp.asarray(w1, jnp.float32),
            jnp.asarray(b1, jnp.float32).reshape(1, hidden),
            jnp.asarray(w2, jnp.bfloat16),
            jnp.asarray(b2, jnp.float32).reshape(1, hidden),
            w3p,
            jnp.asarray(b3, jnp.float32).reshape(1, n_actions))


if __name__ == "__main__":
    # LunarLander-v2: observation dim = 8, n_actions = 4.
    input_dims = 8
    n_actions = 4
    batch = 256          # 2 grid steps of 128 -> both v7x TensorCores active

    key = jax.random.PRNGKey(0)
    key_params, key_state = jax.random.split(key)

    raw = init_policy_params(key_params, input_dims, n_actions)
    prepared = prepare_policy_params(*raw)       # hoisted: done once, not per call
    prepared = jax.block_until_ready(prepared)

    state = jax.random.normal(key_state, (batch, input_dims), jnp.float32)

    def run(buffered):
        return jax.block_until_ready(
            policy_forward(state, *prepared, buffered=buffered))

    try:
        out = run(True)     # single-buffered resident weights
    except Exception:
        # Fallback for JAX versions without pipeline_mode support in pallas_call.
        out = run(False)

    assert out.shape == (batch, n_actions)

    w1, b1, w2, b2, w3, b3 = raw

    # Reference 1: same mixed-precision math (f32 fc1, bf16 fc2/fc3 inputs,
    # f32 accumulation).
    h = jnp.maximum(state @ w1 + b1, 0.0)
    h = jnp.maximum(jnp.dot(h.astype(jnp.bfloat16), w2.astype(jnp.bfloat16),
                            preferred_element_type=jnp.float32) + b2, 0.0)
    ref_mixed = jnp.dot(h.astype(jnp.bfloat16), w3.astype(jnp.bfloat16),
                        preferred_element_type=jnp.float32) + b3
    assert jnp.allclose(out, ref_mixed, atol=5e-3, rtol=5e-3)

    # Reference 2: full-f32 PyTorch-equivalent math (loose tol: bf16 fc2/fc3).
    ref_f32 = jnp.maximum(state @ w1 + b1, 0.0)
    ref_f32 = jnp.maximum(ref_f32 @ w2 + b2, 0.0)
    ref_f32 = ref_f32 @ w3 + b3
    assert jnp.allclose(out, ref_f32, atol=5e-2, rtol=5e-2)

    print("KERNEL_OK")
</pallas_src>

<mosaic_0001>
module attributes {stable_mosaic.version = 11 : i64} {
  func.func @_policy_mlp_kernel(%arg0: i32, %arg1: memref<128x8xf32, #tpu.memory_space<vmem>>, %arg2: memref<8x128xf32, #tpu.memory_space<vmem>>, %arg3: memref<1x128xf32, #tpu.memory_space<vmem>>, %arg4: memref<128x128xbf16, #tpu.memory_space<vmem>>, %arg5: memref<1x128xf32, #tpu.memory_space<vmem>>, %arg6: memref<128x128xbf16, #tpu.memory_space<vmem>>, %arg7: memref<1x4xf32, #tpu.memory_space<vmem>>, %arg8: memref<128x4xf32, #tpu.memory_space<vmem>>) attributes {dimension_semantics = [#tpu.dimension_semantics<parallel>], iteration_bounds = array<i64: 2>, scalar_prefetch = 0 : i64, scratch_operands = 0 : i64, tpu.core_type = #tpu.core_type<tc>, window_params = [{transform_indices = @transform_0, window_bounds = array<i64: 128, 8>}, {pipeline_mode = #tpu.pipeline_mode<synchronous>, transform_indices = @transform_1, window_bounds = array<i64: 8, 128>}, {pipeline_mode = #tpu.pipeline_mode<synchronous>, transform_indices = @transform_2, window_bounds = array<i64: 1, 128>}, {pipeline_mode = #tpu.pipeline_mode<synchronous>, transform_indices = @transform_3, window_bounds = array<i64: 128, 128>}, {pipeline_mode = #tpu.pipeline_mode<synchronous>, transform_indices = @transform_4, window_bounds = array<i64: 1, 128>}, {pipeline_mode = #tpu.pipeline_mode<synchronous>, transform_indices = @transform_5, window_bounds = array<i64: 128, 128>}, {pipeline_mode = #tpu.pipeline_mode<synchronous>, transform_indices = @transform_6, window_bounds = array<i64: 1, 4>}, {transform_indices = @transform_7, window_bounds = array<i64: 128, 4>}]} {
    %c0 = arith.constant 0 : index
    %c0_0 = arith.constant 0 : index
    %0 = vector.load %arg1[%c0, %c0_0] : memref<128x8xf32, #tpu.memory_space<vmem>>, vector<128x8xf32>
    %c0_1 = arith.constant 0 : index
    %c0_2 = arith.constant 0 : index
    %1 = vector.load %arg2[%c0_1, %c0_2] : memref<8x128xf32, #tpu.memory_space<vmem>>, vector<8x128xf32>
    %cst = arith.constant dense<0.000000e+00> : vector<128x128xf32>
    %2 = tpu.matmul %0, %1, %cst {dimension_numbers = #tpu.dot_dimension_numbers<[1], [0], [0], [1], [0, 0, 1, 1], [], []>} : vector<128x8xf32>, vector<8x128xf32>, vector<128x128xf32> -> vector<128x128xf32>
    %c0_3 = arith.constant 0 : index
    %c0_4 = arith.constant 0 : index
    %3 = vector.load %arg3[%c0_3, %c0_4] : memref<1x128xf32, #tpu.memory_space<vmem>>, vector<1x128xf32>
    %4 = vector.broadcast %3 : vector<1x128xf32> to vector<128x128xf32>
    %5 = arith.addf %2, %4 : vector<128x128xf32>
    %cst_5 = arith.constant 0.000000e+00 : f32
    %6 = vector.broadcast %cst_5 : f32 to vector<128x128xf32>
    %7 = arith.maximumf %5, %6 : vector<128x128xf32>
    %8 = arith.truncf %7 : vector<128x128xf32> to vector<128x128xbf16>
    %c0_6 = arith.constant 0 : index
    %c0_7 = arith.constant 0 : index
    %9 = vector.load %arg4[%c0_6, %c0_7] : memref<128x128xbf16, #tpu.memory_space<vmem>>, vector<128x128xbf16>
    %cst_8 = arith.constant dense<0.000000e+00> : vector<128x128xf32>
    %10 = tpu.matmul %8, %9, %cst_8 {dimension_numbers = #tpu.dot_dimension_numbers<[1], [0], [0], [1], [0, 0, 1, 1], [], []>} : vector<128x128xbf16>, vector<128x128xbf16>, vector<128x128xf32> -> vector<128x128xf32>
    %c0_9 = arith.constant 0 : index
    %c0_10 = arith.constant 0 : index
    %11 = vector.load %arg5[%c0_9, %c0_10] : memref<1x128xf32, #tpu.memory_space<vmem>>, vector<1x128xf32>
    %12 = vector.broadcast %11 : vector<1x128xf32> to vector<128x128xf32>
    %13 = arith.addf %10, %12 : vector<128x128xf32>
    %cst_11 = arith.constant 0.000000e+00 : f32
    %14 = vector.broadcast %cst_11 : f32 to vector<128x128xf32>
    %15 = arith.maximumf %13, %14 : vector<128x128xf32>
    %16 = arith.truncf %15 : vector<128x128xf32> to vector<128x128xbf16>
    %c0_12 = arith.constant 0 : index
    %c0_13 = arith.constant 0 : index
    %17 = vector.load %arg6[%c0_12, %c0_13] : memref<128x128xbf16, #tpu.memory_space<vmem>>, vector<128x128xbf16>
    %cst_14 = arith.constant dense<0.000000e+00> : vector<128x128xf32>
    %18 = tpu.matmul %16, %17, %cst_14 {dimension_numbers = #tpu.dot_dimension_numbers<[1], [0], [0], [1], [0, 0, 1, 1], [], []>} : vector<128x128xbf16>, vector<128x128xbf16>, vector<128x128xf32> -> vector<128x128xf32>
    %19 = vector.extract_strided_slice %18 {offsets = [0, 0], sizes = [128, 4], strides = [1, 1]} : vector<128x128xf32> to vector<128x4xf32>
    %c0_15 = arith.constant 0 : index
    %c0_16 = arith.constant 0 : index
    %20 = vector.load %arg7[%c0_15, %c0_16] : memref<1x4xf32, #tpu.memory_space<vmem>>, vector<1x4xf32>
    %21 = vector.broadcast %20 : vector<1x4xf32> to vector<128x4xf32>
    %22 = arith.addf %19, %21 : vector<128x4xf32>
    %c0_17 = arith.constant 0 : index
    %c0_18 = arith.constant 0 : index
    %23 = vector.load %arg8[%c0_17, %c0_18] : memref<128x4xf32, #tpu.memory_space<vmem>>, vector<128x4xf32>
    tpu.vector_store %arg8[%c0_17, %c0_18], %22 {strides = array<i32>} : memref<128x4xf32, #tpu.memory_space<vmem>>, vector<128x4xf32>,
    return
  }
  func.func @transform_0(%arg0: i32) -> (i32, i32) {
    %c0_i32 = arith.constant 0 : i32
    %c0_i32_0 = arith.constant 0 : i32
    return %arg0, %c0_i32 : i32, i32
  }
  func.func @transform_1(%arg0: i32) -> (i32, i32) {
    %c0_i32 = arith.constant 0 : i32
    %c0_i32_0 = arith.constant 0 : i32
    %c0_i32_1 = arith.constant 0 : i32
    return %c0_i32, %c0_i32_0 : i32, i32
  }
  func.func @transform_2(%arg0: i32) -> (i32, i32) {
    %c0_i32 = arith.constant 0 : i32
    %c0_i32_0 = arith.constant 0 : i32
    %c0_i32_1 = arith.constant 0 : i32
    return %c0_i32, %c0_i32_0 : i32, i32
  }
  func.func @transform_3(%arg0: i32) -> (i32, i32) {
    %c0_i32 = arith.constant 0 : i32
    %c0_i32_0 = arith.constant 0 : i32
    %c0_i32_1 = arith.constant 0 : i32
    return %c0_i32, %c0_i32_0 : i32, i32
  }
  func.func @transform_4(%arg0: i32) -> (i32, i32) {
    %c0_i32 = arith.constant 0 : i32
    %c0_i32_0 = arith.constant 0 : i32
    %c0_i32_1 = arith.constant 0 : i32
    return %c0_i32, %c0_i32_0 : i32, i32
  }
  func.func @transform_5(%arg0: i32) -> (i32, i32) {
    %c0_i32 = arith.constant 0 : i32
    %c0_i32_0 = arith.constant 0 : i32
    %c0_i32_1 = arith.constant 0 : i32
    return %c0_i32, %c0_i32_0 : i32, i32
  }
  func.func @transform_6(%arg0: i32) -> (i32, i32) {
    %c0_i32 = arith.constant 0 : i32
    %c0_i32_0 = arith.constant 0 : i32
    %c0_i32_1 = arith.constant 0 : i32
    return %c0_i32, %c0_i32_0 : i32, i32
  }
  func.func @transform_7(%arg0: i32) -> (i32, i32) {
    %c0_i32 = arith.constant 0 : i32
    %c0_i32_0 = arith.constant 0 : i32
    return %arg0, %c0_i32 : i32, i32
  }
}

module attributes {stable_mosaic.version = 11 : i64} {
  func.func @_policy_mlp_kernel(%arg0: i32, %arg1: memref<128x8xf32, #tpu.memory_space<vmem>>, %arg2: memref<8x128xf32, #tpu.memory_space<vmem>>, %arg3: memref<1x128xf32, #tpu.memory_space<vmem>>, %arg4: memref<128x128xbf16, #tpu.memory_space<vmem>>, %arg5: memref<1x128xf32, #tpu.memory_space<vmem>>, %arg6: memref<128x128xbf16, #tpu.memory_space<vmem>>, %arg7: memref<1x4xf32, #tpu.memory_space<vmem>>, %arg8: memref<128x4xf32, #tpu.memory_space<vmem>>) attributes {dimension_semantics = [#tpu.dimension_semantics<parallel>], iteration_bounds = array<i64: 2>, scalar_prefetch = 0 : i64, scratch_operands = 0 : i64, tpu.core_type = #tpu.core_type<tc>, window_params = [{transform_indices = @transform_0, window_bounds = array<i64: 128, 8>}, {pipeline_mode = #tpu.pipeline_mode<synchronous>, transform_indices = @transform_1, window_bounds = array<i64: 8, 128>}, {pipeline_mode = #tpu.pipeline_mode<synchronous>, transform_indices = @transform_2, window_bounds = array<i64: 1, 128>}, {pipeline_mode = #tpu.pipeline_mode<synchronous>, transform_indices = @transform_3, window_bounds = array<i64: 128, 128>}, {pipeline_mode = #tpu.pipeline_mode<synchronous>, transform_indices = @transform_4, window_bounds = array<i64: 1, 128>}, {pipeline_mode = #tpu.pipeline_mode<synchronous>, transform_indices = @transform_5, window_bounds = array<i64: 128, 128>}, {pipeline_mode = #tpu.pipeline_mode<synchronous>, transform_indices = @transform_6, window_bounds = array<i64: 1, 4>}, {transform_indices = @transform_7, window_bounds = array<i64: 128, 4>}]} {
    %c0 = arith.constant 0 : index
    %c0_0 = arith.constant 0 : index
    %0 = vector.load %arg1[%c0, %c0_0] : memref<128x8xf32, #tpu.memory_space<vmem>>, vector<128x8xf32>
    %c0_1 = arith.constant 0 : index
    %c0_2 = arith.constant 0 : index
    %1 = vector.load %arg2[%c0_1, %c0_2] : memref<8x128xf32, #tpu.memory_space<vmem>>, vector<8x128xf32>
    %cst = arith.constant dense<0.000000e+00> : vector<128x128xf32>
    %2 = tpu.matmul %0, %1, %cst {dimension_numbers = #tpu.dot_dimension_numbers<[1], [0], [0], [1], [0, 0, 1, 1], [], []>} : vector<128x8xf32>, vector<8x128xf32>, vector<128x128xf32> -> vector<128x128xf32>
    %c0_3 = arith.constant 0 : index
    %c0_4 = arith.constant 0 : index
    %3 = vector.load %arg3[%c0_3, %c0_4] : memref<1x128xf32, #tpu.memory_space<vmem>>, vector<1x128xf32>
    %4 = vector.broadcast %3 : vector<1x128xf32> to vector<128x128xf32>
    %5 = arith.addf %2, %4 : vector<128x128xf32>
    %cst_5 = arith.constant 0.000000e+00 : f32
    %6 = vector.broadcast %cst_5 : f32 to vector<128x128xf32>
    %7 = arith.maximumf %5, %6 : vector<128x128xf32>
    %8 = arith.truncf %7 : vector<128x128xf32> to vector<128x128xbf16>
    %c0_6 = arith.constant 0 : index
    %c0_7 = arith.constant 0 : index
    %9 = vector.load %arg4[%c0_6, %c0_7] : memref<128x128xbf16, #tpu.memory_space<vmem>>, vector<128x128xbf16>
    %cst_8 = arith.constant dense<0.000000e+00> : vector<128x128xf32>
    %10 = tpu.matmul %8, %9, %cst_8 {dimension_numbers = #tpu.dot_dimension_numbers<[1], [0], [0], [1], [0, 0, 1, 1], [], []>} : vector<128x128xbf16>, vector<128x128xbf16>, vector<128x128xf32> -> vector<128x128xf32>
    %c0_9 = arith.constant 0 : index
    %c0_10 = arith.constant 0 : index
    %11 = vector.load %arg5[%c0_9, %c0_10] : memref<1x128xf32, #tpu.memory_space<vmem>>, vector<1x128xf32>
    %12 = vector.broadcast %11 : vector<1x128xf32> to vector<128x128xf32>
    %13 = arith.addf %10, %12 : vector<128x128xf32>
    %cst_11 = arith.constant 0.000000e+00 : f32
    %14 = vector.broadcast %cst_11 : f32 to vector<128x128xf32>
    %15 = arith.maximumf %13, %14 : vector<128x128xf32>
    %16 = arith.truncf %15 : vector<128x128xf32> to vector<128x128xbf16>
    %c0_12 = arith.constant 0 : index
    %c0_13 = arith.constant 0 : index
    %17 = vector.load %arg6[%c0_12, %c0_13] : memref<128x128xbf16, #tpu.memory_space<vmem>>, vector<128x128xbf16>
    %cst_14 = arith.constant dense<0.000000e+00> : vector<128x128xf32>
    %18 = tpu.matmul %16, %17, %cst_14 {dimension_numbers = #tpu.dot_dimension_numbers<[1], [0], [0], [1], [0, 0, 1, 1], [], []>} : vector<128x128xbf16>, vector<128x128xbf16>, vector<128x128xf32> -> vector<128x128xf32>
    %19 = vector.extract_strided_slice %18 {offsets = [0, 0], sizes = [128, 4], strides = [1, 1]} : vector<128x128xf32> to vector<128x4xf32>
    %c0_15 = arith.constant 0 : index
    %c0_16 = arith.constant 0 : index
    %20 = vector.load %arg7[%c0_15, %c0_16] : memref<1x4xf32, #tpu.memory_space<vmem>>, vector<1x4xf32>
    %21 = vector.broadcast %20 : vector<1x4xf32> to vector<128x4xf32>
    %22 = arith.addf %19, %21 : vector<128x4xf32>
    %c0_17 = arith.constant 0 : index
    %c0_18 = arith.constant 0 : index
    %23 = vector.load %arg8[%c0_17, %c0_18] : memref<128x4xf32, #tpu.memory_space<vmem>>, vector<128x4xf32>
    tpu.vector_store %arg8[%c0_17, %c0_18], %22 {strides = array<i32>} : memref<128x4xf32, #tpu.memory_space<vmem>>, vector<128x4xf32>,
    return
  }
  func.func @transform_0(%arg0: i32) -> (i32, i32) {
    %c0_i32 = arith.constant 0 : i32
    %c0_i32_0 = arith.constant 0 : i32
    return %arg0, %c0_i32 : i32, i32
  }
  func.func @transform_1(%arg0: i32) -> (i32, i32) {
    %c0_i32 = arith.constant 0 : i32
    %c0_i32_0 = arith.constant 0 : i32
    %c0_i32_1 = arith.constant 0 : i32
    return %c0_i32, %c0_i32_0 : i32, i32
  }
  func.func @transform_2(%arg0: i32) -> (i32, i32) {
    %c0_i32 = arith.constant 0 : i32
    %c0_i32_0 = arith.constant 0 : i32
    %c0_i32_1 = arith.constant 0 : i32
    return %c0_i32, %c0_i32_0 : i32, i32
  }
  func.func @transform_3(%arg0: i32) -> (i32, i32) {
    %c0_i32 = arith.constant 0 : i32
    %c0_i32_0 = arith.constant 0 : i32
    %c0_i32_1 = arith.constant 0 : i32
    return %c0_i32, %c0_i32_0 : i32, i32
  }
  func.func @transform_4(%arg0: i32) -> (i32, i32) {
    %c0_i32 = arith.constant 0 : i32
    %c0_i32_0 = arith.constant 0 : i32
    %c0_i32_1 = arith.constant 0 : i32
    return %c0_i32, %c0_i32_0 : i32, i32
  }
  func.func @transform_5(%arg0: i32) -> (i32, i32) {
    %c0_i32 = arith.constant 0 : i32
    %c0_i32_0 = arith.constant 0 : i32
    %c0_i32_1 = arith.constant 0 : i32
    return %c0_i32, %c0_i32_0 : i32, i32
  }
  func.func @transform_6(%arg0: i32) -> (i32, i32) {
    %c0_i32 = arith.constant 0 : i32
    %c0_i32_0 = arith.constant 0 : i32
    %c0_i32_1 = arith.constant 0 : i32
    return %c0_i32, %c0_i32_0 : i32, i32
  }
  func.func @transform_7(%arg0: i32) -> (i32, i32) {
    %c0_i32 = arith.constant 0 : i32
    %c0_i32_0 = arith.constant 0 : i32
    return %arg0, %c0_i32 : i32, i32
  }
}

</mosaic_0001>

<llo_original>
// kernel: policy_forward.1
$region0: #{policy_forward.1}
  #allocation0 [shape = 'u32[]', space=smem, size = 0x4, offset = 0x4, fixed_abs, tag = 'smem constant byte address 0x4 - core index']
  #allocation1 [shape = 'u32[144,128]{1,0:T(1,128)}', space=vmem, size = 0x12000, scoped, tag = 'internal scratch']
  %s0 = inlined_call_operand.vmem [shape: f32[256,8], index: 0, kind: input, shape index: {}]
  %s1 = inlined_call_operand.vmem [shape: f32[8,128], index: 1, kind: input, shape index: {}]
  %s2 = inlined_call_operand.vmem [shape: f32[1,128], index: 2, kind: input, shape index: {}]
  %s3 = inlined_call_operand.vmem [shape: bf16[128,128], index: 3, kind: input, shape index: {}]
  %s4 = inlined_call_operand.vmem [shape: f32[1,128], index: 4, kind: input, shape index: {}]
  %s5 = inlined_call_operand.vmem [shape: bf16[128,128], index: 5, kind: input, shape index: {}]
  %s6 = inlined_call_operand.vmem [shape: f32[1,4], index: 6, kind: input, shape index: {}]
  %s7 = inlined_call_operand.vmem [shape: f32[256,4], index: 7, kind: output, shape index: {}]
  %s8 = sld [smem:[#allocation0]]
  $region61: #{policy_forward.1} parent=0
    _
  %s10 = ssub.s32 1, %s8
  %s11 = scalar_select 0, %s10, %s8
  loop: start=0, step=1, limit=4
  $region2: #{policy_forward.1} parent=0 // loop_pre_header
    _
  $region3: #{policy_forward.1} parent=0 // loop_header
    %s13 = sphi 0, %s17
    %p14 = scmp.ge.s32.totalorder %s13, 4
    %s23 = sphi 0, %s25
    %s26 = sphi 0, %s23
    %s27 = sphi 0, %s26
    %s43 = sphi 0, %s27
    %s47 = sphi 0, %s47
    %s49 = sphi 0, %s47
    %s50 = sphi 0, %s49
    %s64 = sphi 0, %s50
    %s68 = sphi 0, %s68
    %s70 = sphi 0, %s68
    %s71 = sphi 0, %s70
    %s85 = sphi 0, %s71
    %s89 = sphi 0, %s89
    %s91 = sphi 0, %s89
    %s92 = sphi 0, %s91
    %s106 = sphi 0, %s92
    %s110 = sphi 0, %s110
    %s112 = sphi 0, %s110
    %s113 = sphi 0, %s112
    %s127 = sphi 0, %s113
    %s131 = sphi 0, %s131
    %s133 = sphi 0, %s131
    %s134 = sphi 0, %s133
    %s148 = sphi 0, %s134
    %s152 = sphi 0, %s152
    %s154 = sphi 0, %s152
    %s155 = sphi 0, %s154
    %s169 = sphi 0, %s155
    %s175 = sphi 0, %s177
    %s178 = sphi 0, %s175
    %s179 = sphi 0, %s178
    %s195 = sphi 0, %s179
  $region4: #{policy_forward.1} parent=0 // loop_header_branch
    %16 = sbr.rel (%p14) target = $region8
  $region5: #{policy_forward.1} parent=0 // loop_body
    %s18 = ssub.s32 %s13, 1
    %s19 = ssub.s32 %s13, 2
    %s20 = sadd.s32 %s13, 1
    %s21 = ssub.s32 %s13, %s20
    %p22 = scmp.eq.s32.totalorder %s21, 0
    %s24 = sadd.s32 %s23, 1
    %s25 = scalar_select %p22, %s23, %s24
    %p28 = pneg %p22
    %p29 = scmp.eq.s32.totalorder %s13, 1
    %p30 = por %p28, %p29
    %p31 = scmp.ne.s32.totalorder %s23, %s26
    %p32 = scmp.eq.s32.totalorder %s13, 0
    %p33 = por %p31, %p32
    %p34 = scmp.ne.s32.totalorder %s23, %s26
    %p35 = scmp.eq.s32.totalorder %s18, 1
    %p36 = por %p34, %p35
    %p37 = scmp.ne.s32.totalorder %s26, %s27
    %p38 = scmp.eq.s32.totalorder %s18, 0
    %p39 = por %p37, %p38
    %p40 = scmp.ne.s32.totalorder %s26, %s27
    %p41 = scmp.eq.s32.totalorder %s19, 1
    %p42 = por %p40, %p41
    %p44 = scmp.ne.s32.totalorder %s27, %s43
    %p45 = scmp.eq.s32.totalorder %s19, 0
    %p46 = por %p44, %p45
    %s48 = sadd.s32 %s47, 1
    %p51 = scmp.eq.s32.totalorder %s13, 1
    %p52 = scmp.ne.s32.totalorder %s47, %s49
    %p53 = scmp.eq.s32.totalorder %s13, 0
    %p54 = por %p52, %p53
    %p55 = scmp.ne.s32.totalorder %s47, %s49
    %p56 = scmp.eq.s32.totalorder %s18, 1
    %p57 = por %p55, %p56
    %p58 = scmp.ne.s32.totalorder %s49, %s50
    %p59 = scmp.eq.s32.totalorder %s18, 0
    %p60 = por %p58, %p59
    %p61 = scmp.ne.s32.totalorder %s49, %s50
    %p62 = scmp.eq.s32.totalorder %s19, 1
    %p63 = por %p61, %p62
    %p65 = scmp.ne.s32.totalorder %s50, %s64
    %p66 = scmp.eq.s32.totalorder %s19, 0
    %p67 = por %p65, %p66
    %s69 = sadd.s32 %s68, 1
    %p72 = scmp.eq.s32.totalorder %s13, 1
    %p73 = scmp.ne.s32.totalorder %s68, %s70
    %p74 = scmp.eq.s32.totalorder %s13, 0
    %p75 = por %p73, %p74
    %p76 = scmp.ne.s32.totalorder %s68, %s70
    %p77 = scmp.eq.s32.totalorder %s18, 1
    %p78 = por %p76, %p77
    %p79 = scmp.ne.s32.totalorder %s70, %s71
    %p80 = scmp.eq.s32.totalorder %s18, 0
    %p81 = por %p79, %p80
    %p82 = scmp.ne.s32.totalorder %s70, %s71
    %p83 = scmp.eq.s32.totalorder %s19, 1
    %p84 = por %p82, %p83
    %p86 = scmp.ne.s32.totalorder %s71, %s85
    %p87 = scmp.eq.s32.totalorder %s19, 0
    %p88 = por %p86, %p87
    %s90 = sadd.s32 %s89, 1
    %p93 = scmp.eq.s32.totalorder %s13, 1
    %p94 = scmp.ne.s32.totalorder %s89, %s91
    %p95 = scmp.eq.s32.totalorder %s13, 0
    %p96 = por %p94, %p95
    %p97 = scmp.ne.s32.totalorder %s89, %s91
    %p98 = scmp.eq.s32.totalorder %s18, 1
    %p99 = por %p97, %p98
    %p100 = scmp.ne.s32.totalorder %s91, %s92
    %p101 = scmp.eq.s32.totalorder %s18, 0
    %p102 = por %p100, %p101
    %p103 = scmp.ne.s32.totalorder %s91, %s92
    %p104 = scmp.eq.s32.totalorder %s19, 1
    %p105 = por %p103, %p104
    %p107 = scmp.ne.s32.totalorder %s92, %s106
    %p108 = scmp.eq.s32.totalorder %s19, 0
    %p109 = por %p107, %p108
    %s111 = sadd.s32 %s110, 1
    %p114 = scmp.eq.s32.totalorder %s13, 1
    %p115 = scmp.ne.s32.totalorder %s110, %s112
    %p116 = scmp.eq.s32.totalorder %s13, 0
    %p117 = por %p115, %p116
    %p118 = scmp.ne.s32.totalorder %s110, %s112
    %p119 = scmp.eq.s32.totalorder %s18, 1
    %p120 = por %p118, %p119
    %p121 = scmp.ne.s32.totalorder %s112, %s113
    %p122 = scmp.eq.s32.totalorder %s18, 0
    %p123 = por %p121, %p122
    %p124 = scmp.ne.s32.totalorder %s112, %s113
    %p125 = scmp.eq.s32.totalorder %s19, 1
    %p126 = por %p124, %p125
    %p128 = scmp.ne.s32.totalorder %s113, %s127
    %p129 = scmp.eq.s32.totalorder %s19, 0
    %p130 = por %p128, %p129
    %s132 = sadd.s32 %s131, 1
    %p135 = scmp.eq.s32.totalorder %s13, 1
    %p136 = scmp.ne.s32.totalorder %s131, %s133
    %p137 = scmp.eq.s32.totalorder %s13, 0
    %p138 = por %p136, %p137
    %p139 = scmp.ne.s32.totalorder %s131, %s133
    %p140 = scmp.eq.s32.totalorder %s18, 1
    %p141 = por %p139, %p140
    %p142 = scmp.ne.s32.totalorder %s133, %s134
    %p143 = scmp.eq.s32.totalorder %s18, 0
    %p144 = por %p142, %p143
    %p145 = scmp.ne.s32.totalorder %s133, %s134
    %p146 = scmp.eq.s32.totalorder %s19, 1
    %p147 = por %p145, %p146
    %p149 = scmp.ne.s32.totalorder %s134, %s148
    %p150 = scmp.eq.s32.totalorder %s19, 0
    %p151 = por %p149, %p150
    %s153 = sadd.s32 %s152, 1
    %p156 = scmp.eq.s32.totalorder %s13, 1
    %p157 = scmp.ne.s32.totalorder %s152, %s154
    %p158 = scmp.eq.s32.totalorder %s13, 0
    %p159 = por %p157, %p158
    %p160 = scmp.ne.s32.totalorder %s152, %s154
    %p161 = scmp.eq.s32.totalorder %s18, 1
    %p162 = por %p160, %p161
    %p163 = scmp.ne.s32.totalorder %s154, %s155
    %p164 = scmp.eq.s32.totalorder %s18, 0
    %p165 = por %p163, %p164
    %p166 = scmp.ne.s32.totalorder %s154, %s155
    %p167 = scmp.eq.s32.totalorder %s19, 1
    %p168 = por %p166, %p167
    %p170 = scmp.ne.s32.totalorder %s155, %s169
    %p171 = scmp.eq.s32.totalorder %s19, 0
    %p172 = por %p170, %p171
    %s173 = ssub.s32 %s13, %s20
    %p174 = scmp.eq.s32.totalorder %s173, 0
    %s176 = sadd.s32 %s175, 1
    %s177 = scalar_select %p174, %s175, %s176
    %p180 = pneg %p174
    %p181 = scmp.eq.s32.totalorder %s13, 1
    %p182 = por %p180, %p181
    %p183 = scmp.ne.s32.totalorder %s175, %s178
    %p184 = scmp.eq.s32.totalorder %s13, 0
    %p185 = por %p183, %p184
    %p186 = scmp.ne.s32.totalorder %s175, %s178
    %p187 = scmp.eq.s32.totalorder %s18, 1
    %p188 = por %p186, %p187
    %p189 = scmp.ne.s32.totalorder %s178, %s179
    %p190 = scmp.eq.s32.totalorder %s18, 0
    %p191 = por %p189, %p190
    %p192 = scmp.ne.s32.totalorder %s178, %s179
    %p193 = scmp.eq.s32.totalorder %s19, 1
    %p194 = por %p192, %p193
    %p196 = scmp.ne.s32.totalorder %s179, %s195
    %p197 = scmp.eq.s32.totalorder %s19, 0
    %p198 = por %p196, %p197
    %p199 = scmp.le.s32.totalorder 1, %s13
    %p200 = scmp.lt.s32.totalorder %s13, 3
    %p201 = pnand %p199, %p200
    %p202 = pneg %p201
    // Predicated region
    $region9: #{policy_forward.1} parent=5 // pred_check
      _
    $region10: #{policy_forward.1} parent=5 // pred_check_branch
      %204 = sbr.rel (%p201) target = $region12
    $region11: #{policy_forward.1} parent=5 // pred_region
      %s205 = ssub.s32 %s13, 1
      // Predicated region
      $region13: #{policy_forward.1} parent=11 // pred_check
        %p206 = pneg %p60
      $region14: #{policy_forward.1} parent=11 // pred_check_branch
        %208 = sbr.rel (%p206) target = $region16
      $region15: #{policy_forward.1} parent=11 // pred_region
        _
      $region16: #{policy_forward.1} parent=11 // pred_fallthru
        _
      // Predicated region
      $region17: #{policy_forward.1} parent=11 // pred_check
        %p209 = pneg %p81
      $region18: #{policy_forward.1} parent=11 // pred_check_branch
        %211 = sbr.rel (%p209) target = $region20
      $region19: #{policy_forward.1} parent=11 // pred_region
        _
      $region20: #{policy_forward.1} parent=11 // pred_fallthru
        _
      // Predicated region
      $region21: #{policy_forward.1} parent=11 // pred_check
        %p212 = pneg %p102
      $region22: #{policy_forward.1} parent=11 // pred_check_branch
        %214 = sbr.rel (%p212) target = $region24
      $region23: #{policy_forward.1} parent=11 // pred_region
        _
      $region24: #{policy_forward.1} parent=11 // pred_fallthru
        _
      // Predicated region
      $region25: #{policy_forward.1} parent=11 // pred_check
        %p215 = pneg %p123
      $region26: #{policy_forward.1} parent=11 // pred_check_branch
        %217 = sbr.rel (%p215) target = $region28
      $region27: #{policy_forward.1} parent=11 // pred_region
        _
      $region28: #{policy_forward.1} parent=11 // pred_fallthru
        _
      // Predicated region
      $region29: #{policy_forward.1} parent=11 // pred_check
        %p218 = pneg %p144
      $region30: #{policy_forward.1} parent=11 // pred_check_branch
        %220 = sbr.rel (%p218) target = $region32
      $region31: #{policy_forward.1} parent=11 // pred_region
        _
      $region32: #{policy_forward.1} parent=11 // pred_fallthru
        _
      // Predicated region
      $region33: #{policy_forward.1} parent=11 // pred_check
        %p221 = pneg %p165
      $region34: #{policy_forward.1} parent=11 // pred_check_branch
        %223 = sbr.rel (%p221) target = $region36
      $region35: #{policy_forward.1} parent=11 // pred_region
        _
      $region36: #{policy_forward.1} parent=11 // pred_fallthru
        _
    $region12: #{policy_forward.1} parent=5 // pred_fallthru
      _
    %p224 = scmp.lt.s32.totalorder %s13, 2
    // Predicated region
    $region37: #{policy_forward.1} parent=5 // pred_check
      %p225 = pneg %p224
    $region38: #{policy_forward.1} parent=5 // pred_check_branch
      %227 = sbr.rel (%p225) target = $region40
    $region39: #{policy_forward.1} parent=5 // pred_region
      // Predicated region
      $region41: #{policy_forward.1} parent=39 // pred_check
        %p228 = pneg %p33
      $region42: #{policy_forward.1} parent=39 // pred_check_branch
        %230 = sbr.rel (%p228) target = $region44
      $region43: #{policy_forward.1} parent=39 // pred_region
        %s231 = smul.u32 16, %s13
        %p232 = scmp.lt.s32.totalorder %s231, 31
        %s233 = scalar_select %p232, %s231, 31
        %s234 = smul.addr %s233, 8
        %s235 = scalar_lea.vmem %s0, %s234
        %s236 = smul.u32 16, %s13
      $region44: #{policy_forward.1} parent=39 // pred_fallthru
        _
    $region40: #{policy_forward.1} parent=5 // pred_fallthru
      _
    %p237 = scmp.le.s32.totalorder 1, %s13
    %p238 = scmp.lt.s32.totalorder %s13, 3
    %p239 = pnand %p237, %p238
    %p240 = pneg %p239
    // Predicated region
    $region45: #{policy_forward.1} parent=5 // pred_check
      _
    $region46: #{policy_forward.1} parent=5 // pred_check_branch
      %242 = sbr.rel (%p239) target = $region48
    $region47: #{policy_forward.1} parent=5 // pred_region
      %s243 = ssub.s32 %s13, 1
      %s244 = smul.u32 16, %s18
      %p245 = scmp.lt.s32.totalorder %s244, 31
      %s246 = scalar_select %p245, %s244, 31
      %s247 = smul.addr %s246, 8
      %s248 = scalar_lea.vmem %s0, %s247
      %p249 = pneg %p39
      %p250 = pneg %p36
      %p251 = pneg %p60
      %p252 = pneg %p57
      %p253 = pneg %p81
      %p254 = pneg %p78
      %p255 = pneg %p102
      %p256 = pneg %p99
      %p257 = pneg %p123
      %p258 = pneg %p120
      %p259 = pneg %p144
      %p260 = pneg %p141
      %p261 = pneg %p165
      %p262 = pneg %p162
      %p263 = pneg %p191
      %p264 = pneg %p188
      %s265 = smul.u32 16, %s18
      %p266 = scmp.lt.s32.totalorder %s265, 31
      %s267 = scalar_select %p266, %s265, 31
      %s268 = smul.addr %s267, 8
      %s269 = scalar_lea.vmem %s7, %s268
      %s270 = smul.u32 16, %s18
      %p271 = scmp.lt.s32.totalorder %s270, 31
      %s272 = scalar_select %p271, %s270, 31
      %s273 = smul.addr %s272, 8
      %s274 = scalar_lea.vmem %s0, %s273
      %s275 = smul.u32 16, %s18
      %s276 = smul.u32 16, %s18
      %p277 = scmp.lt.s32.totalorder %s276, 31
      %s278 = scalar_select %p277, %s276, 31
      %s279 = smul.addr %s278, 8
      %s280 = scalar_lea.vmem %s7, %s279
      %s281 = smul.u32 16, %s18
      %v283 = vld [vmem:[%s274] sm:$0xff]
      %v284 = vld [vmem:[%s274 + $0x8] sm:$0xff]
      %v285 = vld [vmem:[%s274 + $0x10] sm:$0xff]
      %v286 = vld [vmem:[%s274 + $0x18] sm:$0xff]
      %v287 = vld [vmem:[%s274 + $0x20] sm:$0xff]
      %v288 = vld [vmem:[%s274 + $0x28] sm:$0xff]
      %v289 = vld [vmem:[%s274 + $0x30] sm:$0xff]
      %v290 = vld [vmem:[%s274 + $0x38] sm:$0xff]
      %v291 = vld [vmem:[%s274 + $0x40] sm:$0xff]
      %v292 = vld [vmem:[%s274 + $0x48] sm:$0xff]
      %v293 = vld [vmem:[%s274 + $0x50] sm:$0xff]
      %v294 = vld [vmem:[%s274 + $0x58] sm:$0xff]
      %v295 = vld [vmem:[%s274 + $0x60] sm:$0xff]
      %v296 = vld [vmem:[%s274 + $0x68] sm:$0xff]
      %v297 = vld [vmem:[%s274 + $0x70] sm:$0xff]
      %v298 = vld [vmem:[%s274 + $0x78] sm:$0xff]
      %v299 = vld [vmem:[%s1] sm:$0xff]
      %v300 = vld [vmem:[%s2] sm:$0x1]
      %v302 = vlaneseq
      %v303 = vshrl.u32 %v302, 7
      %v304 = vsub.s32 0, %v303
      %v305 = vrot.slane %v300, %v304
      %vm307 = vcmask 64512
      %v309 = vsel %vm307, %v283, 0
      %v312 = vsel %vm307, %v284, 0
      %v315 = vsel %vm307, %v285, 0
      %v318 = vsel %vm307, %v286, 0
      %v321 = vsel %vm307, %v287, 0
      %v324 = vsel %vm307, %v288, 0
      %v327 = vsel %vm307, %v289, 0
      %v330 = vsel %vm307, %v290, 0
      %v333 = vsel %vm307, %v291, 0
      %v336 = vsel %vm307, %v292, 0
      %v339 = vsel %vm307, %v293, 0
      %v342 = vsel %vm307, %v294, 0
      %v345 = vsel %vm307, %v295, 0
      %v348 = vsel %vm307, %v296, 0
      %v351 = vsel %vm307, %v297, 0
      %v354 = vsel %vm307, %v298, 0
      %356 = vmatprep.subr.mxu0 0.0
      %357 = vmatpush1.msra.mxu0 %v299
      %358 = vmatprep.subr.mxu0 0.0
      %359 = vmatpush1.msra.mxu0 0.0
      %360 = vmatprep.subr.mxu0 0.0
      %361 = vmatpush1.msra.mxu0 0.0
      %362 = vmatprep.subr.mxu0 0.0
      %363 = vmatpush1.msra.mxu0 0.0
      %364 = vmatprep.subr.mxu0 0.0
      %365 = vmatpush1.msra.mxu0 0.0
      %366 = vmatprep.subr.mxu0 0.0
      %367 = vmatpush1.msra.mxu0 0.0
      %368 = vmatprep.subr.mxu0 0.0
      %369 = vmatpush1.msra.mxu0 0.0
      %370 = vmatprep.subr.mxu0 0.0
      %371 = vmatpush1.msra.mxu0 0.0
      %372 = vmatprep.subr.mxu0 0.0
      %373 = vmatpush1.msra.mxu0 0.0
      %374 = vmatprep.subr.mxu0 0.0
      %375 = vmatpush1.msra.mxu0 0.0
      %376 = vmatprep.subr.mxu0 0.0
      %377 = vmatpush1.msra.mxu0 0.0
      %378 = vmatprep.subr.mxu0 0.0
      %379 = vmatpush1.msra.mxu0 0.0
      %380 = vmatprep.subr.mxu0 0.0
      %381 = vmatpush1.msra.mxu0 0.0
      %382 = vmatprep.subr.mxu0 0.0
      %383 = vmatpush1.msra.mxu0 0.0
      %384 = vmatprep.subr.mxu0 0.0
      %385 = vmatpush1.msra.mxu0 0.0
      %386 = vmatprep.subr.mxu0 0.0
      %387 = vmatpush1.msra.mxu0 0.0
      %388 = vmatprep.subr.mxu0 0.0
      %389 = vmatpush1.msra.mxu0 0.0
      %390 = vmatprep.subr.mxu0 0.0
      %391 = vmatpush1.msra.mxu0 0.0
      %392 = vmatprep.subr.mxu0 0.0
      %393 = vmatpush1.msra.mxu0 0.0
      %394 = vmatprep.subr.mxu0 0.0
      %395 = vmatpush1.msra.mxu0 0.0
      %396 = vmatprep.subr.mxu0 0.0
      %397 = vmatpush1.msra.mxu0 0.0
      %398 = vmatprep.subr.mxu0 0.0
      %399 = vmatpush1.msra.mxu0 0.0
      %400 = vmatprep.subr.mxu0 0.0
      %401 = vmatpush1.msra.mxu0 0.0
      %402 = vmatprep.subr.mxu0 0.0
      %403 = vmatpush1.msra.mxu0 0.0
      %404 = vmatprep.subr.mxu0 0.0
      %405 = vmatpush1.msra.mxu0 0.0
      %406 = vmatprep.subr.mxu0 0.0
      %407 = vmatpush1.msra.mxu0 0.0
      %408 = vmatprep.subr.mxu0 0.0
      %409 = vmatpush1.msra.mxu0 0.0
      %410 = vmatprep.subr.mxu0 0.0
      %411 = vmatpush1.msra.mxu0 0.0
      %412 = vmatprep.subr.mxu0 0.0
      %413 = vmatpush1.msra.mxu0 0.0
      %414 = vmatprep.subr.mxu0 0.0
      %415 = vmatpush1.msra.mxu0 0.0
      %416 = vmatprep.subr.mxu0 0.0
      %417 = vmatpush1.msra.mxu0 0.0
      %418 = vmatprep.subr.mxu0 0.0
      %419 = vmatpush1.msra.mxu0 0.0
      %420 = vmatprep.mubr.f32.mxu0 0.0
      %421 = vmatmul.mubr.f32.gmra.mrb[0].mxu0 %v309
      %v422 = vpop.f32.mrb[0].mxu0
      %v423 = vadd.f32 %v305, %v422
      %v424 = vpop.f32.mrb[0].mxu0
      %425 = vmatprep.mubr.f32.mxu0 0.0
      %426 = vmatmul.mubr.f32.gmra.mrb[0].mxu0 %v312
      %v427 = vpop.f32.mrb[0].mxu0
      %v428 = vadd.f32 %v305, %v427
      %v429 = vpop.f32.mrb[0].mxu0
      %430 = vmatprep.mubr.f32.mxu0 0.0
      %431 = vmatmul.mubr.f32.gmra.mrb[0].mxu0 %v315
      %v432 = vpop.f32.mrb[0].mxu0
      %v433 = vadd.f32 %v305, %v432
      %v434 = vpop.f32.mrb[0].mxu0
      %435 = vmatprep.mubr.f32.mxu0 0.0
      %436 = vmatmul.mubr.f32.gmra.mrb[0].mxu0 %v318
      %v437 = vpop.f32.mrb[0].mxu0
      %v438 = vadd.f32 %v305, %v437
      %v439 = vpop.f32.mrb[0].mxu0
      %440 = vmatprep.mubr.f32.mxu0 0.0
      %441 = vmatmul.mubr.f32.gmra.mrb[0].mxu0 %v321
      %v442 = vpop.f32.mrb[0].mxu0
      %v443 = vadd.f32 %v305, %v442
      %v444 = vpop.f32.mrb[0].mxu0
      %445 = vmatprep.mubr.f32.mxu0 0.0
      %446 = vmatmul.mubr.f32.gmra.mrb[0].mxu0 %v324
      %v447 = vpop.f32.mrb[0].mxu0
      %v448 = vadd.f32 %v305, %v447
      %v449 = vpop.f32.mrb[0].mxu0
      %450 = vmatprep.mubr.f32.mxu0 0.0
      %451 = vmatmul.mubr.f32.gmra.mrb[0].mxu0 %v327
      %v452 = vpop.f32.mrb[0].mxu0
      %v453 = vadd.f32 %v305, %v452
      %v454 = vpop.f32.mrb[0].mxu0
      %455 = vmatprep.mubr.f32.mxu0 0.0
      %456 = vmatmul.mubr.f32.gmra.mrb[0].mxu0 %v330
      %v457 = vpop.f32.mrb[0].mxu0
      %v458 = vadd.f32 %v305, %v457
      %v459 = vpop.f32.mrb[0].mxu0
      %460 = vmatprep.mubr.f32.mxu0 0.0
      %461 = vmatmul.mubr.f32.gmra.mrb[0].mxu0 %v333
      %v462 = vpop.f32.mrb[0].mxu0
      %v463 = vadd.f32 %v305, %v462
      %v464 = vpop.f32.mrb[0].mxu0
      %465 = vmatprep.mubr.f32.mxu0 0.0
      %466 = vmatmul.mubr.f32.gmra.mrb[0].mxu0 %v336
      %v467 = vpop.f32.mrb[0].mxu0
      %v468 = vadd.f32 %v305, %v467
      %v469 = vpop.f32.mrb[0].mxu0
      %470 = vmatprep.mubr.f32.mxu0 0.0
      %471 = vmatmul.mubr.f32.gmra.mrb[0].mxu0 %v339
      %v472 = vpop.f32.mrb[0].mxu0
      %v473 = vadd.f32 %v305, %v472
      %v474 = vpop.f32.mrb[0].mxu0
      %475 = vmatprep.mubr.f32.mxu0 0.0
      %476 = vmatmul.mubr.f32.gmra.mrb[0].mxu0 %v342
      %v477 = vpop.f32.mrb[0].mxu0
      %v478 = vadd.f32 %v305, %v477
      %v479 = vpop.f32.mrb[0].mxu0
      %480 = vmatprep.mubr.f32.mxu0 0.0
      %481 = vmatmul.mubr.f32.gmra.mrb[0].mxu0 %v345
      %v482 = vpop.f32.mrb[0].mxu0
      %v483 = vadd.f32 %v305, %v482
      %v484 = vpop.f32.mrb[0].mxu0
      %485 = vmatprep.mubr.f32.mxu0 0.0
      %486 = vmatmul.mubr.f32.gmra.mrb[0].mxu0 %v348
      %v487 = vpop.f32.mrb[0].mxu0
      %v488 = vadd.f32 %v305, %v487
      %v489 = vpop.f32.mrb[0].mxu0
      %490 = vmatprep.mubr.f32.mxu0 0.0
      %491 = vmatmul.mubr.f32.gmra.mrb[0].mxu0 %v351
      %v492 = vpop.f32.mrb[0].mxu0
      %v493 = vadd.f32 %v305, %v492
      %v494 = vpop.f32.mrb[0].mxu0
      %495 = vmatprep.mubr.f32.mxu0 0.0
      %496 = vmatmul.mubr.f32.gmra.mrb[0].mxu0 %v354
      %v497 = vpop.f32.mrb[0].mxu0
      %v498 = vadd.f32 %v305, %v497
      %v499 = vpop.f32.mrb[0].mxu0
      %500 = vdwg.mxu0
      %v501 = vmax.f32 %v423, 0.0
      %v502 = vmax.f32 %v428, 0.0
      %v503 = vmax.f32 %v433, 0.0
      %v504 = vmax.f32 %v438, 0.0
      %v505 = vmax.f32 %v443, 0.0
      %v506 = vmax.f32 %v448, 0.0
      %v507 = vmax.f32 %v453, 0.0
      %v508 = vmax.f32 %v458, 0.0
      %v509 = vmax.f32 %v463, 0.0
      %v510 = vmax.f32 %v468, 0.0
      %v511 = vmax.f32 %v473, 0.0
      %v512 = vmax.f32 %v478, 0.0
      %v513 = vmax.f32 %v483, 0.0
      %v514 = vmax.f32 %v488, 0.0
      %v515 = vmax.f32 %v493, 0.0
      %v516 = vmax.f32 %v498, 0.0
      %v517 = vpack.c.bf16 %v502, %v501
      %v518 = vpack.c.bf16 %v504, %v503
      %v519 = vpack.c.bf16 %v506, %v505
      %v520 = vpack.c.bf16 %v508, %v507
      %v521 = vpack.c.bf16 %v510, %v509
      %v522 = vpack.c.bf16 %v512, %v511
      %v523 = vpack.c.bf16 %v514, %v513
      %v524 = vpack.c.bf16 %v516, %v515
      %v525 = vld [vmem:[%s3] sm:$0xf]
      %v526 = vld [vmem:[%s3 + $0x4] sm:$0xf]
      %v527 = vld [vmem:[%s3 + $0x8] sm:$0xf]
      %v528 = vld [vmem:[%s3 + $0xc] sm:$0xf]
      %v529 = vld [vmem:[%s3 + $0x10] sm:$0xf]
      %v530 = vld [vmem:[%s3 + $0x14] sm:$0xf]
      %v531 = vld [vmem:[%s3 + $0x18] sm:$0xf]
      %v532 = vld [vmem:[%s3 + $0x1c] sm:$0xf]
      %v533 = vld [vmem:[%s3 + $0x20] sm:$0xf]
      %v534 = vld [vmem:[%s3 + $0x24] sm:$0xf]
      %v535 = vld [vmem:[%s3 + $0x28] sm:$0xf]
      %v536 = vld [vmem:[%s3 + $0x2c] sm:$0xf]
      %v537 = vld [vmem:[%s3 + $0x30] sm:$0xf]
      %v538 = vld [vmem:[%s3 + $0x34] sm:$0xf]
      %v539 = vld [vmem:[%s3 + $0x38] sm:$0xf]
      %v540 = vld [vmem:[%s3 + $0x3c] sm:$0xf]
      %v541 = vld [vmem:[%s4] sm:$0x1]
      %v543 = vlaneseq
      %v544 = vshrl.u32 %v543, 7
      %v545 = vsub.s32 0, %v544
      %v546 = vrot.slane %v541, %v545
      %v564 = vunpack.c.l.b16 %v525
      %v565 = vunpack.c.l.b16 %v526
      %v566 = vunpack.c.l.b16 %v527
      %v567 = vunpack.c.l.b16 %v528
      %v568 = vunpack.c.l.b16 %v529
      %v569 = vunpack.c.l.b16 %v530
      %v570 = vunpack.c.l.b16 %v531
      %v571 = vunpack.c.l.b16 %v532
      %v572 = vunpack.c.l.b16 %v533
      %v573 = vunpack.c.l.b16 %v534
      %v574 = vunpack.c.l.b16 %v535
      %v575 = vunpack.c.l.b16 %v536
      %v576 = vunpack.c.l.b16 %v537
      %v577 = vunpack.c.l.b16 %v538
      %v578 = vunpack.c.l.b16 %v539
      %v579 = vunpack.c.l.b16 %v540
      %v580 = vpack.c.b16 %v565, %v564
      %v581 = vpack.c.b16 %v567, %v566
      %v582 = vpack.c.b16 %v569, %v568
      %v583 = vpack.c.b16 %v571, %v570
      %v584 = vpack.c.b16 %v573, %v572
      %v585 = vpack.c.b16 %v575, %v574
      %v586 = vpack.c.b16 %v577, %v576
      %v587 = vpack.c.b16 %v579, %v578
      %596 = vmatprep.subr.bf16.mxu0 0
      %597 = vmatpush1.bf16.msra.mxu0 %v580
      %598 = vmatprep.subr.bf16.mxu0 0
      %599 = vmatpush1.bf16.msra.mxu0 %v581
      %600 = vmatprep.subr.bf16.mxu0 0
      %601 = vmatpush1.bf16.msra.mxu0 %v582
      %602 = vmatprep.subr.bf16.mxu0 0
      %603 = vmatpush1.bf16.msra.mxu0 %v583
      %604 = vmatprep.subr.bf16.mxu0 0
      %605 = vmatpush1.bf16.msra.mxu0 %v584
      %606 = vmatprep.subr.bf16.mxu0 0
      %607 = vmatpush1.bf16.msra.mxu0 %v585
      %608 = vmatprep.subr.bf16.mxu0 0
      %609 = vmatpush1.bf16.msra.mxu0 %v586
      %610 = vmatprep.subr.bf16.mxu0 0
      %611 = vmatpush1.bf16.msra.mxu0 %v587
      %612 = vmatprep.subr.bf16.mxu0 0
      %613 = vmatpush1.bf16.msra.mxu0 0
      %614 = vmatprep.subr.bf16.mxu0 0
      %615 = vmatpush1.bf16.msra.mxu0 0
      %616 = vmatprep.subr.bf16.mxu0 0
      %617 = vmatpush1.bf16.msra.mxu0 0
      %618 = vmatprep.subr.bf16.mxu0 0
      %619 = vmatpush1.bf16.msra.mxu0 0
      %620 = vmatprep.subr.bf16.mxu0 0
      %621 = vmatpush1.bf16.msra.mxu0 0
      %622 = vmatprep.subr.bf16.mxu0 0
      %623 = vmatpush1.bf16.msra.mxu0 0
      %624 = vmatprep.subr.bf16.mxu0 0
      %625 = vmatpush1.bf16.msra.mxu0 0
      %626 = vmatprep.subr.bf16.mxu0 0
      %627 = vmatpush1.bf16.msra.mxu0 0
      %628 = vmatprep.mubr.bf16.mxu0 0
      %629 = vmatmul.mubr.bf16.gmra.mrb[0].mxu0 %v517
      %v630 = vpop.f32.mrb[0].mxu0
      %v631 = vadd.f32 %v546, %v630
      %v632 = vpop.f32.mrb[0].mxu0
      %v633 = vpop.f32.mrb[0].mxu0
      %v634 = vadd.f32 %v546, %v633
      %v635 = vpop.f32.mrb[0].mxu0
      %636 = vmatprep.mubr.bf16.mxu0 0
      %637 = vmatmul.mubr.bf16.gmra.mrb[0].mxu0 %v518
      %v638 = vpop.f32.mrb[0].mxu0
      %v639 = vadd.f32 %v546, %v638
      %v640 = vpop.f32.mrb[0].mxu0
      %v641 = vpop.f32.mrb[0].mxu0
      %v642 = vadd.f32 %v546, %v641
      %v643 = vpop.f32.mrb[0].mxu0
      %644 = vmatprep.mubr.bf16.mxu0 0
      %645 = vmatmul.mubr.bf16.gmra.mrb[0].mxu0 %v519
      %v646 = vpop.f32.mrb[0].mxu0
      %v647 = vadd.f32 %v546, %v646
      %v648 = vpop.f32.mrb[0].mxu0
      %v649 = vpop.f32.mrb[0].mxu0
      %v650 = vadd.f32 %v546, %v649
      %v651 = vpop.f32.mrb[0].mxu0
      %652 = vmatprep.mubr.bf16.mxu0 0
      %653 = vmatmul.mubr.bf16.gmra.mrb[0].mxu0 %v520
      %v654 = vpop.f32.mrb[0].mxu0
      %v655 = vadd.f32 %v546, %v654
      %v656 = vpop.f32.mrb[0].mxu0
      %v657 = vpop.f32.mrb[0].mxu0
      %v658 = vadd.f32 %v546, %v657
      %v659 = vpop.f32.mrb[0].mxu0
      %660 = vmatprep.mubr.bf16.mxu0 0
      %661 = vmatmul.mubr.bf16.gmra.mrb[0].mxu0 %v521
      %v662 = vpop.f32.mrb[0].mxu0
      %v663 = vadd.f32 %v546, %v662
      %v664 = vpop.f32.mrb[0].mxu0
      %v665 = vpop.f32.mrb[0].mxu0
      %v666 = vadd.f32 %v546, %v665
      %v667 = vpop.f32.mrb[0].mxu0
      %668 = vmatprep.mubr.bf16.mxu0 0
      %669 = vmatmul.mubr.bf16.gmra.mrb[0].mxu0 %v522
      %v670 = vpop.f32.mrb[0].mxu0
      %v671 = vadd.f32 %v546, %v670
      %v672 = vpop.f32.mrb[0].mxu0
      %v673 = vpop.f32.mrb[0].mxu0
      %v674 = vadd.f32 %v546, %v673
      %v675 = vpop.f32.mrb[0].mxu0
      %676 = vmatprep.mubr.bf16.mxu0 0
      %677 = vmatmul.mubr.bf16.gmra.mrb[0].mxu0 %v523
      %v678 = vpop.f32.mrb[0].mxu0
      %v679 = vadd.f32 %v546, %v678
      %v680 = vpop.f32.mrb[0].mxu0
      %v681 = vpop.f32.mrb[0].mxu0
      %v682 = vadd.f32 %v546, %v681
      %v683 = vpop.f32.mrb[0].mxu0
      %684 = vmatprep.mubr.bf16.mxu0 0
      %685 = vmatmul.mubr.bf16.gmra.mrb[0].mxu0 %v524
      %v686 = vpop.f32.mrb[0].mxu0
      %v687 = vadd.f32 %v546, %v686
      %v688 = vpop.f32.mrb[0].mxu0
      %v689 = vpop.f32.mrb[0].mxu0
      %v690 = vadd.f32 %v546, %v689
      %v691 = vpop.f32.mrb[0].mxu0
      %692 = vdwg.mxu0
      %v693 = vmax.f32 %v631, 0.0
      %v694 = vmax.f32 %v634, 0.0
      %v695 = vmax.f32 %v639, 0.0
      %v696 = vmax.f32 %v642, 0.0
      %v697 = vmax.f32 %v647, 0.0
      %v698 = vmax.f32 %v650, 0.0
      %v699 = vmax.f32 %v655, 0.0
      %v700 = vmax.f32 %v658, 0.0
      %v701 = vmax.f32 %v663, 0.0
      %v702 = vmax.f32 %v666, 0.0
      %v703 = vmax.f32 %v671, 0.0
      %v704 = vmax.f32 %v674, 0.0
      %v705 = vmax.f32 %v679, 0.0
      %v706 = vmax.f32 %v682, 0.0
      %v707 = vmax.f32 %v687, 0.0
      %v708 = vmax.f32 %v690, 0.0
      %v709 = vpack.c.bf16 %v694, %v693
      %v710 = vpack.c.bf16 %v696, %v695
      %v711 = vpack.c.bf16 %v698, %v697
      %v712 = vpack.c.bf16 %v700, %v699
      %v713 = vpack.c.bf16 %v702, %v701
      %v714 = vpack.c.bf16 %v704, %v703
      %v715 = vpack.c.bf16 %v706, %v705
      %v716 = vpack.c.bf16 %v708, %v707
      %v717 = vld [vmem:[%s5] sm:$0xf]
      %v718 = vld [vmem:[%s5 + $0x4] sm:$0xf]
      %v719 = vld [vmem:[%s5 + $0x8] sm:$0xf]
      %v720 = vld [vmem:[%s5 + $0xc] sm:$0xf]
      %v721 = vld [vmem:[%s5 + $0x10] sm:$0xf]
      %v722 = vld [vmem:[%s5 + $0x14] sm:$0xf]
      %v723 = vld [vmem:[%s5 + $0x18] sm:$0xf]
      %v724 = vld [vmem:[%s5 + $0x1c] sm:$0xf]
      %v725 = vld [vmem:[%s5 + $0x20] sm:$0xf]
      %v726 = vld [vmem:[%s5 + $0x24] sm:$0xf]
      %v727 = vld [vmem:[%s5 + $0x28] sm:$0xf]
      %v728 = vld [vmem:[%s5 + $0x2c] sm:$0xf]
      %v729 = vld [vmem:[%s5 + $0x30] sm:$0xf]
      %v730 = vld [vmem:[%s5 + $0x34] sm:$0xf]
      %v731 = vld [vmem:[%s5 + $0x38] sm:$0xf]
      %v732 = vld [vmem:[%s5 + $0x3c] sm:$0xf]
      %v749 = vunpack.c.l.b16 %v717
      %v750 = vunpack.c.l.b16 %v718
      %v751 = vunpack.c.l.b16 %v719
      %v752 = vunpack.c.l.b16 %v720
      %v753 = vunpack.c.l.b16 %v721
      %v754 = vunpack.c.l.b16 %v722
      %v755 = vunpack.c.l.b16 %v723
      %v756 = vunpack.c.l.b16 %v724
      %v757 = vunpack.c.l.b16 %v725
      %v758 = vunpack.c.l.b16 %v726
      %v759 = vunpack.c.l.b16 %v727
      %v760 = vunpack.c.l.b16 %v728
      %v761 = vunpack.c.l.b16 %v729
      %v762 = vunpack.c.l.b16 %v730
      %v763 = vunpack.c.l.b16 %v731
      %v764 = vunpack.c.l.b16 %v732
      %v765 = vpack.c.b16 %v750, %v749
      %v766 = vpack.c.b16 %v752, %v751
      %v767 = vpack.c.b16 %v754, %v753
      %v768 = vpack.c.b16 %v756, %v755
      %v769 = vpack.c.b16 %v758, %v757
      %v770 = vpack.c.b16 %v760, %v759
      %v771 = vpack.c.b16 %v762, %v761
      %v772 = vpack.c.b16 %v764, %v763
      %781 = vmatprep.subr.bf16.mxu0 0
      %782 = vmatpush1.bf16.msra.mxu0 %v765
      %783 = vmatprep.subr.bf16.mxu0 0
      %784 = vmatpush1.bf16.msra.mxu0 %v766
      %785 = vmatprep.subr.bf16.mxu0 0
      %786 = vmatpush1.bf16.msra.mxu0 %v767
      %787 = vmatprep.subr.bf16.mxu0 0
      %788 = vmatpush1.bf16.msra.mxu0 %v768
      %789 = vmatprep.subr.bf16.mxu0 0
      %790 = vmatpush1.bf16.msra.mxu0 %v769
      %791 = vmatprep.subr.bf16.mxu0 0
      %792 = vmatpush1.bf16.msra.mxu0 %v770
      %793 = vmatprep.subr.bf16.mxu0 0
      %794 = vmatpush1.bf16.msra.mxu0 %v771
      %795 = vmatprep.subr.bf16.mxu0 0
      %796 = vmatpush1.bf16.msra.mxu0 %v772
      %797 = vmatprep.subr.bf16.mxu0 0
      %798 = vmatpush1.bf16.msra.mxu0 0
      %799 = vmatprep.subr.bf16.mxu0 0
      %800 = vmatpush1.bf16.msra.mxu0 0
      %801 = vmatprep.subr.bf16.mxu0 0
      %802 = vmatpush1.bf16.msra.mxu0 0
      %803 = vmatprep.subr.bf16.mxu0 0
      %804 = vmatpush1.bf16.msra.mxu0 0
      %805 = vmatprep.subr.bf16.mxu0 0
      %806 = vmatpush1.bf16.msra.mxu0 0
      %807 = vmatprep.subr.bf16.mxu0 0
      %808 = vmatpush1.bf16.msra.mxu0 0
      %809 = vmatprep.subr.bf16.mxu0 0
      %810 = vmatpush1.bf16.msra.mxu0 0
      %811 = vmatprep.subr.bf16.mxu0 0
      %812 = vmatpush1.bf16.msra.mxu0 0
      %813 = vmatprep.mubr.bf16.mxu0 0
      %814 = vmatmul.mubr.bf16.gmra.mrb[0].mxu0 %v709
      %v815 = vpop.f32.mrb[0].mxu0
      %v816 = vadd.f32 0.0, %v815
      %v817 = vpop.f32.mrb[0].mxu0
      %v818 = vpop.f32.mrb[0].mxu0
      %v819 = vadd.f32 0.0, %v818
      %v820 = vpop.f32.mrb[0].mxu0
      %821 = vmatprep.mubr.bf16.mxu0 0
      %822 = vmatmul.mubr.bf16.gmra.mrb[0].mxu0 %v710
      %v823 = vpop.f32.mrb[0].mxu0
      %v824 = vadd.f32 0.0, %v823
      %v825 = vpop.f32.mrb[0].mxu0
      %v826 = vpop.f32.mrb[0].mxu0
      %v827 = vadd.f32 0.0, %v826
      %v828 = vpop.f32.mrb[0].mxu0
      %829 = vmatprep.mubr.bf16.mxu0 0
      %830 = vmatmul.mubr.bf16.gmra.mrb[0].mxu0 %v711
      %v831 = vpop.f32.mrb[0].mxu0
      %v832 = vadd.f32 0.0, %v831
      %v833 = vpop.f32.mrb[0].mxu0
      %v834 = vpop.f32.mrb[0].mxu0
      %v835 = vadd.f32 0.0, %v834
      %v836 = vpop.f32.mrb[0].mxu0
      %837 = vmatprep.mubr.bf16.mxu0 0
      %838 = vmatmul.mubr.bf16.gmra.mrb[0].mxu0 %v712
      %v839 = vpop.f32.mrb[0].mxu0
      %v840 = vadd.f32 0.0, %v839
      %v841 = vpop.f32.mrb[0].mxu0
      %v842 = vpop.f32.mrb[0].mxu0
      %v843 = vadd.f32 0.0, %v842
      %v844 = vpop.f32.mrb[0].mxu0
      %845 = vmatprep.mubr.bf16.mxu0 0
      %846 = vmatmul.mubr.bf16.gmra.mrb[0].mxu0 %v713
      %v847 = vpop.f32.mrb[0].mxu0
      %v848 = vadd.f32 0.0, %v847
      %v849 = vpop.f32.mrb[0].mxu0
      %v850 = vpop.f32.mrb[0].mxu0
      %v851 = vadd.f32 0.0, %v850
      %v852 = vpop.f32.mrb[0].mxu0
      %853 = vmatprep.mubr.bf16.mxu0 0
      %854 = vmatmul.mubr.bf16.gmra.mrb[0].mxu0 %v714
      %v855 = vpop.f32.mrb[0].mxu0
      %v856 = vadd.f32 0.0, %v855
      %v857 = vpop.f32.mrb[0].mxu0
      %v858 = vpop.f32.mrb[0].mxu0
      %v859 = vadd.f32 0.0, %v858
      %v860 = vpop.f32.mrb[0].mxu0
      %861 = vmatprep.mubr.bf16.mxu0 0
      %862 = vmatmul.mubr.bf16.gmra.mrb[0].mxu0 %v715
      %v863 = vpop.f32.mrb[0].mxu0
      %v864 = vadd.f32 0.0, %v863
      %v865 = vpop.f32.mrb[0].mxu0
      %v866 = vpop.f32.mrb[0].mxu0
      %v867 = vadd.f32 0.0, %v866
      %v868 = vpop.f32.mrb[0].mxu0
      %869 = vmatprep.mubr.bf16.mxu0 0
      %870 = vmatmul.mubr.bf16.gmra.mrb[0].mxu0 %v716
      %v871 = vpop.f32.mrb[0].mxu0
      %v872 = vadd.f32 0.0, %v871
      %v873 = vpop.f32.mrb[0].mxu0
      %v874 = vpop.f32.mrb[0].mxu0
      %v875 = vadd.f32 0.0, %v874
      %v876 = vpop.f32.mrb[0].mxu0
      %877 = vdwg.mxu0
      %v878 = vld [vmem:[%s6] sm:$0x1]
      %v880 = vlaneseq
      %v881 = vshrl.u32 %v880, 7
      %v882 = vsub.s32 0, %v881
      %v883 = vrot.slane %v878, %v882
      %v885 = vadd.f32 %v816, %v883
      %v886 = vadd.f32 %v819, %v883
      %v887 = vadd.f32 %v824, %v883
      %v888 = vadd.f32 %v827, %v883
      %v889 = vadd.f32 %v832, %v883
      %v890 = vadd.f32 %v835, %v883
      %v891 = vadd.f32 %v840, %v883
      %v892 = vadd.f32 %v843, %v883
      %v893 = vadd.f32 %v848, %v883
      %v894 = vadd.f32 %v851, %v883
      %v895 = vadd.f32 %v856, %v883
      %v896 = vadd.f32 %v859, %v883
      %v897 = vadd.f32 %v864, %v883
      %v898 = vadd.f32 %v867, %v883
      %v899 = vadd.f32 %v872, %v883
      %v900 = vadd.f32 %v875, %v883
      %vm901 = vcmask 31744
      %902 = vst.msk [vmem:[%s280] sm:$0xff] %vm901, %v885
      %903 = vst.msk [vmem:[%s280 + $0x8] sm:$0xff] %vm901, %v886
      %904 = vst.msk [vmem:[%s280 + $0x10] sm:$0xff] %vm901, %v887
      %905 = vst.msk [vmem:[%s280 + $0x18] sm:$0xff] %vm901, %v888
      %906 = vst.msk [vmem:[%s280 + $0x20] sm:$0xff] %vm901, %v889
      %907 = vst.msk [vmem:[%s280 + $0x28] sm:$0xff] %vm901, %v890
      %908 = vst.msk [vmem:[%s280 + $0x30] sm:$0xff] %vm901, %v891
      %909 = vst.msk [vmem:[%s280 + $0x38] sm:$0xff] %vm901, %v892
      %910 = vst.msk [vmem:[%s280 + $0x40] sm:$0xff] %vm901, %v893
      %911 = vst.msk [vmem:[%s280 + $0x48] sm:$0xff] %vm901, %v894
      %912 = vst.msk [vmem:[%s280 + $0x50] sm:$0xff] %vm901, %v895
      %913 = vst.msk [vmem:[%s280 + $0x58] sm:$0xff] %vm901, %v896
      %914 = vst.msk [vmem:[%s280 + $0x60] sm:$0xff] %vm901, %v897
      %915 = vst.msk [vmem:[%s280 + $0x68] sm:$0xff] %vm901, %v898
      %916 = vst.msk [vmem:[%s280 + $0x70] sm:$0xff] %vm901, %v899
      %917 = vst.msk [vmem:[%s280 + $0x78] sm:$0xff] %vm901, %v900
      %s918 = smul.u32 16, %s18
      %p919 = scmp.lt.s32.totalorder %s918, 31
      %s920 = scalar_select %p919, %s918, 31
      %s921 = smul.addr %s920, 8
      %s922 = scalar_lea.vmem %s7, %s921
      // Predicated region
      $region49: #{policy_forward.1} parent=47 // pred_check
        %p923 = pneg %p188
      $region50: #{policy_forward.1} parent=47 // pred_check_branch
        %925 = sbr.rel (%p923) target = $region52
      $region51: #{policy_forward.1} parent=47 // pred_region
        %s926 = smul.u32 16, %s18
      $region52: #{policy_forward.1} parent=47 // pred_fallthru
        _
    $region48: #{policy_forward.1} parent=5 // pred_fallthru
      _
    %p927 = scmp.le.s32.totalorder 2, %s13
    // Predicated region
    $region53: #{policy_forward.1} parent=5 // pred_check
      %p928 = pneg %p927
    $region54: #{policy_forward.1} parent=5 // pred_check_branch
      %930 = sbr.rel (%p928) target = $region56
    $region55: #{policy_forward.1} parent=5 // pred_region
      %s931 = ssub.s32 %s13, 2
      // Predicated region
      $region57: #{policy_forward.1} parent=55 // pred_check
        %p932 = pneg %p194
      $region58: #{policy_forward.1} parent=55 // pred_check_branch
        %934 = sbr.rel (%p932) target = $region60
      $region59: #{policy_forward.1} parent=55 // pred_region
        %s935 = smul.u32 16, %s19
        %p936 = scmp.lt.s32.totalorder %s935, 31
        %s937 = scalar_select %p936, %s935, 31
        %s938 = smul.addr %s937, 8
        %s939 = scalar_lea.vmem %s7, %s938
      $region60: #{policy_forward.1} parent=55 // pred_fallthru
        _
    $region56: #{policy_forward.1} parent=5 // pred_fallthru
      _
  $region6: #{policy_forward.1} parent=0 // loop_footer
    %s17 = sadd.s32 1, %s13
  $region7: #{policy_forward.1} parent=0 // loop_footer_branch
    %12 = sbr.rel target = $region3
  $region8: #{policy_forward.1} parent=0 // loop_exit
    _

// kernel: policy_forward.1
$region0: #{policy_forward.1}
  #allocation0 [shape = 'u32[]', space=smem, size = 0x4, offset = 0x4, fixed_abs, tag = 'smem constant byte address 0x4 - core index']
  #allocation1 [shape = 'u32[144,128]{1,0:T(1,128)}', space=vmem, size = 0x12000, scoped, tag = 'internal scratch']
  %s0 = inlined_call_operand.vmem [shape: f32[256,8], index: 0, kind: input, shape index: {}]
  %s1 = inlined_call_operand.vmem [shape: f32[8,128], index: 1, kind: input, shape index: {}]
  %s2 = inlined_call_operand.vmem [shape: f32[1,128], index: 2, kind: input, shape index: {}]
  %s3 = inlined_call_operand.vmem [shape: bf16[128,128], index: 3, kind: input, shape index: {}]
  %s4 = inlined_call_operand.vmem [shape: f32[1,128], index: 4, kind: input, shape index: {}]
  %s5 = inlined_call_operand.vmem [shape: bf16[128,128], index: 5, kind: input, shape index: {}]
  %s6 = inlined_call_operand.vmem [shape: f32[1,4], index: 6, kind: input, shape index: {}]
  %s7 = inlined_call_operand.vmem [shape: f32[256,4], index: 7, kind: output, shape index: {}]
  %s8 = sld [smem:[#allocation0]]
  $region61: #{policy_forward.1} parent=0
    _
  %s10 = ssub.s32 1, %s8
  %s11 = scalar_select 0, %s10, %s8
  loop: start=0, step=1, limit=4
  $region2: #{policy_forward.1} parent=0 // loop_pre_header
    _
  $region3: #{policy_forward.1} parent=0 // loop_header
    %s13 = sphi 0, %s17
    %p14 = scmp.ge.s32.totalorder %s13, 4
    %s23 = sphi 0, %s25
    %s26 = sphi 0, %s23
    %s27 = sphi 0, %s26
    %s43 = sphi 0, %s27
    %s47 = sphi 0, %s47
    %s49 = sphi 0, %s47
    %s50 = sphi 0, %s49
    %s64 = sphi 0, %s50
    %s68 = sphi 0, %s68
    %s70 = sphi 0, %s68
    %s71 = sphi 0, %s70
    %s85 = sphi 0, %s71
    %s89 = sphi 0, %s89
    %s91 = sphi 0, %s89
    %s92 = sphi 0, %s91
    %s106 = sphi 0, %s92
    %s110 = sphi 0, %s110
    %s112 = sphi 0, %s110
    %s113 = sphi 0, %s112
    %s127 = sphi 0, %s113
    %s131 = sphi 0, %s131
    %s133 = sphi 0, %s131
    %s134 = sphi 0, %s133
    %s148 = sphi 0, %s134
    %s152 = sphi 0, %s152
    %s154 = sphi 0, %s152
    %s155 = sphi 0, %s154
    %s169 = sphi 0, %s155
    %s175 = sphi 0, %s177
    %s178 = sphi 0, %s175
    %s179 = sphi 0, %s178
    %s195 = sphi 0, %s179
  $region4: #{policy_forward.1} parent=0 // loop_header_branch
    %16 = sbr.rel (%p14) target = $region8
  $region5: #{policy_forward.1} parent=0 // loop_body
    %s18 = ssub.s32 %s13, 1
    %s19 = ssub.s32 %s13, 2
    %s20 = sadd.s32 %s13, 1
    %s21 = ssub.s32 %s13, %s20
    %p22 = scmp.eq.s32.totalorder %s21, 0
    %s24 = sadd.s32 %s23, 1
    %s25 = scalar_select %p22, %s23, %s24
    %p28 = pneg %p22
    %p29 = scmp.eq.s32.totalorder %s13, 1
    %p30 = por %p28, %p29
    %p31 = scmp.ne.s32.totalorder %s23, %s26
    %p32 = scmp.eq.s32.totalorder %s13, 0
    %p33 = por %p31, %p32
    %p34 = scmp.ne.s32.totalorder %s23, %s26
    %p35 = scmp.eq.s32.totalorder %s18, 1
    %p36 = por %p34, %p35
    %p37 = scmp.ne.s32.totalorder %s26, %s27
    %p38 = scmp.eq.s32.totalorder %s18, 0
    %p39 = por %p37, %p38
    %p40 = scmp.ne.s32.totalorder %s26, %s27
    %p41 = scmp.eq.s32.totalorder %s19, 1
    %p42 = por %p40, %p41
    %p44 = scmp.ne.s32.totalorder %s27, %s43
    %p45 = scmp.eq.s32.totalorder %s19, 0
    %p46 = por %p44, %p45
    %s48 = sadd.s32 %s47, 1
    %p51 = scmp.eq.s32.totalorder %s13, 1
    %p52 = scmp.ne.s32.totalorder %s47, %s49
    %p53 = scmp.eq.s32.totalorder %s13, 0
    %p54 = por %p52, %p53
    %p55 = scmp.ne.s32.totalorder %s47, %s49
    %p56 = scmp.eq.s32.totalorder %s18, 1
    %p57 = por %p55, %p56
    %p58 = scmp.ne.s32.totalorder %s49, %s50
    %p59 = scmp.eq.s32.totalorder %s18, 0
    %p60 = por %p58, %p59
    %p61 = scmp.ne.s32.totalorder %s49, %s50
    %p62 = scmp.eq.s32.totalorder %s19, 1
    %p63 = por %p61, %p62
    %p65 = scmp.ne.s32.totalorder %s50, %s64
    %p66 = scmp.eq.s32.totalorder %s19, 0
    %p67 = por %p65, %p66
    %s69 = sadd.s32 %s68, 1
    %p72 = scmp.eq.s32.totalorder %s13, 1
    %p73 = scmp.ne.s32.totalorder %s68, %s70
    %p74 = scmp.eq.s32.totalorder %s13, 0
    %p75 = por %p73, %p74
    %p76 = scmp.ne.s32.totalorder %s68, %s70
    %p77 = scmp.eq.s32.totalorder %s18, 1
    %p78 = por %p76, %p77
    %p79 = scmp.ne.s32.totalorder %s70, %s71
    %p80 = scmp.eq.s32.totalorder %s18, 0
    %p81 = por %p79, %p80
    %p82 = scmp.ne.s32.totalorder %s70, %s71
    %p83 = scmp.eq.s32.totalorder %s19, 1
    %p84 = por %p82, %p83
    %p86 = scmp.ne.s32.totalorder %s71, %s85
    %p87 = scmp.eq.s32.totalorder %s19, 0
    %p88 = por %p86, %p87
    %s90 = sadd.s32 %s89, 1
    %p93 = scmp.eq.s32.totalorder %s13, 1
    %p94 = scmp.ne.s32.totalorder %s89, %s91
    %p95 = scmp.eq.s32.totalorder %s13, 0
    %p96 = por %p94, %p95
    %p97 = scmp.ne.s32.totalorder %s89, %s91
    %p98 = scmp.eq.s32.totalorder %s18, 1
    %p99 = por %p97, %p98
    %p100 = scmp.ne.s32.totalorder %s91, %s92
    %p101 = scmp.eq.s32.totalorder %s18, 0
    %p102 = por %p100, %p101
    %p103 = scmp.ne.s32.totalorder %s91, %s92
    %p104 = scmp.eq.s32.totalorder %s19, 1
    %p105 = por %p103, %p104
    %p107 = scmp.ne.s32.totalorder %s92, %s106
    %p108 = scmp.eq.s32.totalorder %s19, 0
    %p109 = por %p107, %p108
    %s111 = sadd.s32 %s110, 1
    %p114 = scmp.eq.s32.totalorder %s13, 1
    %p115 = scmp.ne.s32.totalorder %s110, %s112
    %p116 = scmp.eq.s32.totalorder %s13, 0
    %p117 = por %p115, %p116
    %p118 = scmp.ne.s32.totalorder %s110, %s112
    %p119 = scmp.eq.s32.totalorder %s18, 1
    %p120 = por %p118, %p119
    %p121 = scmp.ne.s32.totalorder %s112, %s113
    %p122 = scmp.eq.s32.totalorder %s18, 0
    %p123 = por %p121, %p122
    %p124 = scmp.ne.s32.totalorder %s112, %s113
    %p125 = scmp.eq.s32.totalorder %s19, 1
    %p126 = por %p124, %p125
    %p128 = scmp.ne.s32.totalorder %s113, %s127
    %p129 = scmp.eq.s32.totalorder %s19, 0
    %p130 = por %p128, %p129
    %s132 = sadd.s32 %s131, 1
    %p135 = scmp.eq.s32.totalorder %s13, 1
    %p136 = scmp.ne.s32.totalorder %s131, %s133
    %p137 = scmp.eq.s32.totalorder %s13, 0
    %p138 = por %p136, %p137
    %p139 = scmp.ne.s32.totalorder %s131, %s133
    %p140 = scmp.eq.s32.totalorder %s18, 1
    %p141 = por %p139, %p140
    %p142 = scmp.ne.s32.totalorder %s133, %s134
    %p143 = scmp.eq.s32.totalorder %s18, 0
    %p144 = por %p142, %p143
    %p145 = scmp.ne.s32.totalorder %s133, %s134
    %p146 = scmp.eq.s32.totalorder %s19, 1
    %p147 = por %p145, %p146
    %p149 = scmp.ne.s32.totalorder %s134, %s148
    %p150 = scmp.eq.s32.totalorder %s19, 0
    %p151 = por %p149, %p150
    %s153 = sadd.s32 %s152, 1
    %p156 = scmp.eq.s32.totalorder %s13, 1
    %p157 = scmp.ne.s32.totalorder %s152, %s154
    %p158 = scmp.eq.s32.totalorder %s13, 0
    %p159 = por %p157, %p158
    %p160 = scmp.ne.s32.totalorder %s152, %s154
    %p161 = scmp.eq.s32.totalorder %s18, 1
    %p162 = por %p160, %p161
    %p163 = scmp.ne.s32.totalorder %s154, %s155
    %p164 = scmp.eq.s32.totalorder %s18, 0
    %p165 = por %p163, %p164
    %p166 = scmp.ne.s32.totalorder %s154, %s155
    %p167 = scmp.eq.s32.totalorder %s19, 1
    %p168 = por %p166, %p167
    %p170 = scmp.ne.s32.totalorder %s155, %s169
    %p171 = scmp.eq.s32.totalorder %s19, 0
    %p172 = por %p170, %p171
    %s173 = ssub.s32 %s13, %s20
    %p174 = scmp.eq.s32.totalorder %s173, 0
    %s176 = sadd.s32 %s175, 1
    %s177 = scalar_select %p174, %s175, %s176
    %p180 = pneg %p174
    %p181 = scmp.eq.s32.totalorder %s13, 1
    %p182 = por %p180, %p181
    %p183 = scmp.ne.s32.totalorder %s175, %s178
    %p184 = scmp.eq.s32.totalorder %s13, 0
    %p185 = por %p183, %p184
    %p186 = scmp.ne.s32.totalorder %s175, %s178
    %p187 = scmp.eq.s32.totalorder %s18, 1
    %p188 = por %p186, %p187
    %p189 = scmp.ne.s32.totalorder %s178, %s179
    %p190 = scmp.eq.s32.totalorder %s18, 0
    %p191 = por %p189, %p190
    %p192 = scmp.ne.s32.totalorder %s178, %s179
    %p193 = scmp.eq.s32.totalorder %s19, 1
    %p194 = por %p192, %p193
    %p196 = scmp.ne.s32.totalorder %s179, %s195
    %p197 = scmp.eq.s32.totalorder %s19, 0
    %p198 = por %p196, %p197
    %p199 = scmp.le.s32.totalorder 1, %s13
    %p200 = scmp.lt.s32.totalorder %s13, 3
    %p201 = pnand %p199, %p200
    %p202 = pneg %p201
    // Predicated region
    $region9: #{policy_forward.1} parent=5 // pred_check
      _
    $region10: #{policy_forward.1} parent=5 // pred_check_branch
      %204 = sbr.rel (%p201) target = $region12
    $region11: #{policy_forward.1} parent=5 // pred_region
      %s205 = ssub.s32 %s13, 1
      // Predicated region
      $region13: #{policy_forward.1} parent=11 // pred_check
        %p206 = pneg %p60
      $region14: #{policy_forward.1} parent=11 // pred_check_branch
        %208 = sbr.rel (%p206) target = $region16
      $region15: #{policy_forward.1} parent=11 // pred_region
        _
      $region16: #{policy_forward.1} parent=11 // pred_fallthru
        _
      // Predicated region
      $region17: #{policy_forward.1} parent=11 // pred_check
        %p209 = pneg %p81
      $region18: #{policy_forward.1} parent=11 // pred_check_branch
        %211 = sbr.rel (%p209) target = $region20
      $region19: #{policy_forward.1} parent=11 // pred_region
        _
      $region20: #{policy_forward.1} parent=11 // pred_fallthru
        _
      // Predicated region
      $region21: #{policy_forward.1} parent=11 // pred_check
        %p212 = pneg %p102
      $region22: #{policy_forward.1} parent=11 // pred_check_branch
        %214 = sbr.rel (%p212) target = $region24
      $region23: #{policy_forward.1} parent=11 // pred_region
        _
      $region24: #{policy_forward.1} parent=11 // pred_fallthru
        _
      // Predicated region
      $region25: #{policy_forward.1} parent=11 // pred_check
        %p215 = pneg %p123
      $region26: #{policy_forward.1} parent=11 // pred_check_branch
        %217 = sbr.rel (%p215) target = $region28
      $region27: #{policy_forward.1} parent=11 // pred_region
        _
      $region28: #{policy_forward.1} parent=11 // pred_fallthru
        _
      // Predicated region
      $region29: #{policy_forward.1} parent=11 // pred_check
        %p218 = pneg %p144
      $region30: #{policy_forward.1} parent=11 // pred_check_branch
        %220 = sbr.rel (%p218) target = $region32
      $region31: #{policy_forward.1} parent=11 // pred_region
        _
      $region32: #{policy_forward.1} parent=11 // pred_fallthru
        _
      // Predicated region
      $region33: #{policy_forward.1} parent=11 // pred_check
        %p221 = pneg %p165
      $region34: #{policy_forward.1} parent=11 // pred_check_branch
        %223 = sbr.rel (%p221) target = $region36
      $region35: #{policy_forward.1} parent=11 // pred_region
        _
      $region36: #{policy_forward.1} parent=11 // pred_fallthru
        _
    $region12: #{policy_forward.1} parent=5 // pred_fallthru
      _
    %p224 = scmp.lt.s32.totalorder %s13, 2
    // Predicated region
    $region37: #{policy_forward.1} parent=5 // pred_check
      %p225 = pneg %p224
    $region38: #{policy_forward.1} parent=5 // pred_check_branch
      %227 = sbr.rel (%p225) target = $region40
    $region39: #{policy_forward.1} parent=5 // pred_region
      // Predicated region
      $region41: #{policy_forward.1} parent=39 // pred_check
        %p228 = pneg %p33
      $region42: #{policy_forward.1} parent=39 // pred_check_branch
        %230 = sbr.rel (%p228) target = $region44
      $region43: #{policy_forward.1} parent=39 // pred_region
        %s231 = smul.u32 16, %s13
        %p232 = scmp.lt.s32.totalorder %s231, 31
        %s233 = scalar_select %p232, %s231, 31
        %s234 = smul.addr %s233, 8
        %s235 = scalar_lea.vmem %s0, %s234
        %s236 = smul.u32 16, %s13
      $region44: #{policy_forward.1} parent=39 // pred_fallthru
        _
    $region40: #{policy_forward.1} parent=5 // pred_fallthru
      _
    %p237 = scmp.le.s32.totalorder 1, %s13
    %p238 = scmp.lt.s32.totalorder %s13, 3
    %p239 = pnand %p237, %p238
    %p240 = pneg %p239
    // Predicated region
    $region45: #{policy_forward.1} parent=5 // pred_check
      _
    $region46: #{policy_forward.1} parent=5 // pred_check_branch
      %242 = sbr.rel (%p239) target = $region48
    $region47: #{policy_forward.1} parent=5 // pred_region
      %s243 = ssub.s32 %s13, 1
      %s244 = smul.u32 16, %s18
      %p245 = scmp.lt.s32.totalorder %s244, 31
      %s246 = scalar_select %p245, %s244, 31
      %s247 = smul.addr %s246, 8
      %s248 = scalar_lea.vmem %s0, %s247
      %p249 = pneg %p39
      %p250 = pneg %p36
      %p251 = pneg %p60
      %p252 = pneg %p57
      %p253 = pneg %p81
      %p254 = pneg %p78
      %p255 = pneg %p102
      %p256 = pneg %p99
      %p257 = pneg %p123
      %p258 = pneg %p120
      %p259 = pneg %p144
      %p260 = pneg %p141
      %p261 = pneg %p165
      %p262 = pneg %p162
      %p263 = pneg %p191
      %p264 = pneg %p188
      %s265 = smul.u32 16, %s18
      %p266 = scmp.lt.s32.totalorder %s265, 31
      %s267 = scalar_select %p266, %s265, 31
      %s268 = smul.addr %s267, 8
      %s269 = scalar_lea.vmem %s7, %s268
      %s270 = smul.u32 16, %s18
      %p271 = scmp.lt.s32.totalorder %s270, 31
      %s272 = scalar_select %p271, %s270, 31
      %s273 = smul.addr %s272, 8
      %s274 = scalar_lea.vmem %s0, %s273
      %s275 = smul.u32 16, %s18
      %s276 = smul.u32 16, %s18
      %p277 = scmp.lt.s32.totalorder %s276, 31
      %s278 = scalar_select %p277, %s276, 31
      %s279 = smul.addr %s278, 8
      %s280 = scalar_lea.vmem %s7, %s279
      %s281 = smul.u32 16, %s18
      %v283 = vld [vmem:[%s274] sm:$0xff]
      %v284 = vld [vmem:[%s274 + $0x8] sm:$0xff]
      %v285 = vld [vmem:[%s274 + $0x10] sm:$0xff]
      %v286 = vld [vmem:[%s274 + $0x18] sm:$0xff]
      %v287 = vld [vmem:[%s274 + $0x20] sm:$0xff]
      %v288 = vld [vmem:[%s274 + $0x28] sm:$0xff]
      %v289 = vld [vmem:[%s274 + $0x30] sm:$0xff]
      %v290 = vld [vmem:[%s274 + $0x38] sm:$0xff]
      %v291 = vld [vmem:[%s274 + $0x40] sm:$0xff]
      %v292 = vld [vmem:[%s274 + $0x48] sm:$0xff]
      %v293 = vld [vmem:[%s274 + $0x50] sm:$0xff]
      %v294 = vld [vmem:[%s274 + $0x58] sm:$0xff]
      %v295 = vld [vmem:[%s274 + $0x60] sm:$0xff]
      %v296 = vld [vmem:[%s274 + $0x68] sm:$0xff]
      %v297 = vld [vmem:[%s274 + $0x70] sm:$0xff]
      %v298 = vld [vmem:[%s274 + $0x78] sm:$0xff]
      %v299 = vld [vmem:[%s1] sm:$0xff]
      %v300 = vld [vmem:[%s2] sm:$0x1]
      %v302 = vlaneseq
      %v303 = vshrl.u32 %v302, 7
      %v304 = vsub.s32 0, %v303
      %v305 = vrot.slane %v300, %v304
      %vm307 = vcmask 64512
      %v309 = vsel %vm307, %v283, 0
      %v312 = vsel %vm307, %v284, 0
      %v315 = vsel %vm307, %v285, 0
      %v318 = vsel %vm307, %v286, 0
      %v321 = vsel %vm307, %v287, 0
      %v324 = vsel %vm307, %v288, 0
      %v327 = vsel %vm307, %v289, 0
      %v330 = vsel %vm307, %v290, 0
      %v333 = vsel %vm307, %v291, 0
      %v336 = vsel %vm307, %v292, 0
      %v339 = vsel %vm307, %v293, 0
      %v342 = vsel %vm307, %v294, 0
      %v345 = vsel %vm307, %v295, 0
      %v348 = vsel %vm307, %v296, 0
      %v351 = vsel %vm307, %v297, 0
      %v354 = vsel %vm307, %v298, 0
      %356 = vmatprep.subr.mxu0 0.0
      %357 = vmatpush1.msra.mxu0 %v299
      %358 = vmatprep.subr.mxu0 0.0
      %359 = vmatpush1.msra.mxu0 0.0
      %360 = vmatprep.subr.mxu0 0.0
      %361 = vmatpush1.msra.mxu0 0.0
      %362 = vmatprep.subr.mxu0 0.0
      %363 = vmatpush1.msra.mxu0 0.0
      %364 = vmatprep.subr.mxu0 0.0
      %365 = vmatpush1.msra.mxu0 0.0
      %366 = vmatprep.subr.mxu0 0.0
      %367 = vmatpush1.msra.mxu0 0.0
      %368 = vmatprep.subr.mxu0 0.0
      %369 = vmatpush1.msra.mxu0 0.0
      %370 = vmatprep.subr.mxu0 0.0
      %371 = vmatpush1.msra.mxu0 0.0
      %372 = vmatprep.subr.mxu0 0.0
      %373 = vmatpush1.msra.mxu0 0.0
      %374 = vmatprep.subr.mxu0 0.0
      %375 = vmatpush1.msra.mxu0 0.0
      %376 = vmatprep.subr.mxu0 0.0
      %377 = vmatpush1.msra.mxu0 0.0
      %378 = vmatprep.subr.mxu0 0.0
      %379 = vmatpush1.msra.mxu0 0.0
      %380 = vmatprep.subr.mxu0 0.0
      %381 = vmatpush1.msra.mxu0 0.0
      %382 = vmatprep.subr.mxu0 0.0
      %383 = vmatpush1.msra.mxu0 0.0
      %384 = vmatprep.subr.mxu0 0.0
      %385 = vmatpush1.msra.mxu0 0.0
      %386 = vmatprep.subr.mxu0 0.0
      %387 = vmatpush1.msra.mxu0 0.0
      %388 = vmatprep.subr.mxu0 0.0
      %389 = vmatpush1.msra.mxu0 0.0
      %390 = vmatprep.subr.mxu0 0.0
      %391 = vmatpush1.msra.mxu0 0.0
      %392 = vmatprep.subr.mxu0 0.0
      %393 = vmatpush1.msra.mxu0 0.0
      %394 = vmatprep.subr.mxu0 0.0
      %395 = vmatpush1.msra.mxu0 0.0
      %396 = vmatprep.subr.mxu0 0.0
      %397 = vmatpush1.msra.mxu0 0.0
      %398 = vmatprep.subr.mxu0 0.0
      %399 = vmatpush1.msra.mxu0 0.0
      %400 = vmatprep.subr.mxu0 0.0
      %401 = vmatpush1.msra.mxu0 0.0
      %402 = vmatprep.subr.mxu0 0.0
      %403 = vmatpush1.msra.mxu0 0.0
      %404 = vmatprep.subr.mxu0 0.0
      %405 = vmatpush1.msra.mxu0 0.0
      %406 = vmatprep.subr.mxu0 0.0
      %407 = vmatpush1.msra.mxu0 0.0
      %408 = vmatprep.subr.mxu0 0.0
      %409 = vmatpush1.msra.mxu0 0.0
      %410 = vmatprep.subr.mxu0 0.0
      %411 = vmatpush1.msra.mxu0 0.0
      %412 = vmatprep.subr.mxu0 0.0
      %413 = vmatpush1.msra.mxu0 0.0
      %414 = vmatprep.subr.mxu0 0.0
      %415 = vmatpush1.msra.mxu0 0.0
      %416 = vmatprep.subr.mxu0 0.0
      %417 = vmatpush1.msra.mxu0 0.0
      %418 = vmatprep.subr.mxu0 0.0
      %419 = vmatpush1.msra.mxu0 0.0
      %420 = vmatprep.mubr.f32.mxu0 0.0
      %421 = vmatmul.mubr.f32.gmra.mrb[0].mxu0 %v309
      %v422 = vpop.f32.mrb[0].mxu0
      %v423 = vadd.f32 %v305, %v422
      %v424 = vpop.f32.mrb[0].mxu0
      %425 = vmatprep.mubr.f32.mxu0 0.0
      %426 = vmatmul.mubr.f32.gmra.mrb[0].mxu0 %v312
      %v427 = vpop.f32.mrb[0].mxu0
      %v428 = vadd.f32 %v305, %v427
      %v429 = vpop.f32.mrb[0].mxu0
      %430 = vmatprep.mubr.f32.mxu0 0.0
      %431 = vmatmul.mubr.f32.gmra.mrb[0].mxu0 %v315
      %v432 = vpop.f32.mrb[0].mxu0
      %v433 = vadd.f32 %v305, %v432
      %v434 = vpop.f32.mrb[0].mxu0
      %435 = vmatprep.mubr.f32.mxu0 0.0
      %436 = vmatmul.mubr.f32.gmra.mrb[0].mxu0 %v318
      %v437 = vpop.f32.mrb[0].mxu0
      %v438 = vadd.f32 %v305, %v437
      %v439 = vpop.f32.mrb[0].mxu0
      %440 = vmatprep.mubr.f32.mxu0 0.0
      %441 = vmatmul.mubr.f32.gmra.mrb[0].mxu0 %v321
      %v442 = vpop.f32.mrb[0].mxu0
      %v443 = vadd.f32 %v305, %v442
      %v444 = vpop.f32.mrb[0].mxu0
      %445 = vmatprep.mubr.f32.mxu0 0.0
      %446 = vmatmul.mubr.f32.gmra.mrb[0].mxu0 %v324
      %v447 = vpop.f32.mrb[0].mxu0
      %v448 = vadd.f32 %v305, %v447
      %v449 = vpop.f32.mrb[0].mxu0
      %450 = vmatprep.mubr.f32.mxu0 0.0
      %451 = vmatmul.mubr.f32.gmra.mrb[0].mxu0 %v327
      %v452 = vpop.f32.mrb[0].mxu0
      %v453 = vadd.f32 %v305, %v452
      %v454 = vpop.f32.mrb[0].mxu0
      %455 = vmatprep.mubr.f32.mxu0 0.0
      %456 = vmatmul.mubr.f32.gmra.mrb[0].mxu0 %v330
      %v457 = vpop.f32.mrb[0].mxu0
      %v458 = vadd.f32 %v305, %v457
      %v459 = vpop.f32.mrb[0].mxu0
      %460 = vmatprep.mubr.f32.mxu0 0.0
      %461 = vmatmul.mubr.f32.gmra.mrb[0].mxu0 %v333
      %v462 = vpop.f32.mrb[0].mxu0
      %v463 = vadd.f32 %v305, %v462
      %v464 = vpop.f32.mrb[0].mxu0
      %465 = vmatprep.mubr.f32.mxu0 0.0
      %466 = vmatmul.mubr.f32.gmra.mrb[0].mxu0 %v336
      %v467 = vpop.f32.mrb[0].mxu0
      %v468 = vadd.f32 %v305, %v467
      %v469 = vpop.f32.mrb[0].mxu0
      %470 = vmatprep.mubr.f32.mxu0 0.0
      %471 = vmatmul.mubr.f32.gmra.mrb[0].mxu0 %v339
      %v472 = vpop.f32.mrb[0].mxu0
      %v473 = vadd.f32 %v305, %v472
      %v474 = vpop.f32.mrb[0].mxu0
      %475 = vmatprep.mubr.f32.mxu0 0.0
      %476 = vmatmul.mubr.f32.gmra.mrb[0].mxu0 %v342
      %v477 = vpop.f32.mrb[0].mxu0
      %v478 = vadd.f32 %v305, %v477
      %v479 = vpop.f32.mrb[0].mxu0
      %480 = vmatprep.mubr.f32.mxu0 0.0
      %481 = vmatmul.mubr.f32.gmra.mrb[0].mxu0 %v345
      %v482 = vpop.f32.mrb[0].mxu0
      %v483 = vadd.f32 %v305, %v482
      %v484 = vpop.f32.mrb[0].mxu0
      %485 = vmatprep.mubr.f32.mxu0 0.0
      %486 = vmatmul.mubr.f32.gmra.mrb[0].mxu0 %v348
      %v487 = vpop.f32.mrb[0].mxu0
      %v488 = vadd.f32 %v305, %v487
      %v489 = vpop.f32.mrb[0].mxu0
      %490 = vmatprep.mubr.f32.mxu0 0.0
      %491 = vmatmul.mubr.f32.gmra.mrb[0].mxu0 %v351
      %v492 = vpop.f32.mrb[0].mxu0
      %v493 = vadd.f32 %v305, %v492
      %v494 = vpop.f32.mrb[0].mxu0
      %495 = vmatprep.mubr.f32.mxu0 0.0
      %496 = vmatmul.mubr.f32.gmra.mrb[0].mxu0 %v354
      %v497 = vpop.f32.mrb[0].mxu0
      %v498 = vadd.f32 %v305, %v497
      %v499 = vpop.f32.mrb[0].mxu0
      %500 = vdwg.mxu0
      %v501 = vmax.f32 %v423, 0.0
      %v502 = vmax.f32 %v428, 0.0
      %v503 = vmax.f32 %v433, 0.0
      %v504 = vmax.f32 %v438, 0.0
      %v505 = vmax.f32 %v443, 0.0
      %v506 = vmax.f32 %v448, 0.0
      %v507 = vmax.f32 %v453, 0.0
      %v508 = vmax.f32 %v458, 0.0
      %v509 = vmax.f32 %v463, 0.0
      %v510 = vmax.f32 %v468, 0.0
      %v511 = vmax.f32 %v473, 0.0
      %v512 = vmax.f32 %v478, 0.0
      %v513 = vmax.f32 %v483, 0.0
      %v514 = vmax.f32 %v488, 0.0
      %v515 = vmax.f32 %v493, 0.0
      %v516 = vmax.f32 %v498, 0.0
      %v517 = vpack.c.bf16 %v502, %v501
      %v518 = vpack.c.bf16 %v504, %v503
      %v519 = vpack.c.bf16 %v506, %v505
      %v520 = vpack.c.bf16 %v508, %v507
      %v521 = vpack.c.bf16 %v510, %v509
      %v522 = vpack.c.bf16 %v512, %v511
      %v523 = vpack.c.bf16 %v514, %v513
      %v524 = vpack.c.bf16 %v516, %v515
      %v525 = vld [vmem:[%s3] sm:$0xf]
      %v526 = vld [vmem:[%s3 + $0x4] sm:$0xf]
      %v527 = vld [vmem:[%s3 + $0x8] sm:$0xf]
      %v528 = vld [vmem:[%s3 + $0xc] sm:$0xf]
      %v529 = vld [vmem:[%s3 + $0x10] sm:$0xf]
      %v530 = vld [vmem:[%s3 + $0x14] sm:$0xf]
      %v531 = vld [vmem:[%s3 + $0x18] sm:$0xf]
      %v532 = vld [vmem:[%s3 + $0x1c] sm:$0xf]
      %v533 = vld [vmem:[%s3 + $0x20] sm:$0xf]
      %v534 = vld [vmem:[%s3 + $0x24] sm:$0xf]
      %v535 = vld [vmem:[%s3 + $0x28] sm:$0xf]
      %v536 = vld [vmem:[%s3 + $0x2c] sm:$0xf]
      %v537 = vld [vmem:[%s3 + $0x30] sm:$0xf]
      %v538 = vld [vmem:[%s3 + $0x34] sm:$0xf]
      %v539 = vld [vmem:[%s3 + $0x38] sm:$0xf]
      %v540 = vld [vmem:[%s3 + $0x3c] sm:$0xf]
      %v541 = vld [vmem:[%s4] sm:$0x1]
      %v543 = vlaneseq
      %v544 = vshrl.u32 %v543, 7
      %v545 = vsub.s32 0, %v544
      %v546 = vrot.slane %v541, %v545
      %v564 = vunpack.c.l.b16 %v525
      %v565 = vunpack.c.l.b16 %v526
      %v566 = vunpack.c.l.b16 %v527
      %v567 = vunpack.c.l.b16 %v528
      %v568 = vunpack.c.l.b16 %v529
      %v569 = vunpack.c.l.b16 %v530
      %v570 = vunpack.c.l.b16 %v531
      %v571 = vunpack.c.l.b16 %v532
      %v572 = vunpack.c.l.b16 %v533
      %v573 = vunpack.c.l.b16 %v534
      %v574 = vunpack.c.l.b16 %v535
      %v575 = vunpack.c.l.b16 %v536
      %v576 = vunpack.c.l.b16 %v537
      %v577 = vunpack.c.l.b16 %v538
      %v578 = vunpack.c.l.b16 %v539
      %v579 = vunpack.c.l.b16 %v540
      %v580 = vpack.c.b16 %v565, %v564
      %v581 = vpack.c.b16 %v567, %v566
      %v582 = vpack.c.b16 %v569, %v568
      %v583 = vpack.c.b16 %v571, %v570
      %v584 = vpack.c.b16 %v573, %v572
      %v585 = vpack.c.b16 %v575, %v574
      %v586 = vpack.c.b16 %v577, %v576
      %v587 = vpack.c.b16 %v579, %v578
      %596 = vmatprep.subr.bf16.mxu0 0
      %597 = vmatpush1.bf16.msra.mxu0 %v580
      %598 = vmatprep.subr.bf16.mxu0 0
      %599 = vmatpush1.bf16.msra.mxu0 %v581
      %600 = vmatprep.subr.bf16.mxu0 0
      %601 = vmatpush1.bf16.msra.mxu0 %v582
      %602 = vmatprep.subr.bf16.mxu0 0
      %603 = vmatpush1.bf16.msra.mxu0 %v583
      %604 = vmatprep.subr.bf16.mxu0 0
      %605 = vmatpush1.bf16.msra.mxu0 %v584
      %606 = vmatprep.subr.bf16.mxu0 0
      %607 = vmatpush1.bf16.msra.mxu0 %v585
      %608 = vmatprep.subr.bf16.mxu0 0
      %609 = vmatpush1.bf16.msra.mxu0 %v586
      %610 = vmatprep.subr.bf16.mxu0 0
      %611 = vmatpush1.bf16.msra.mxu0 %v587
      %612 = vmatprep.subr.bf16.mxu0 0
      %613 = vmatpush1.bf16.msra.mxu0 0
      %614 = vmatprep.subr.bf16.mxu0 0
      %615 = vmatpush1.bf16.msra.mxu0 0
      %616 = vmatprep.subr.bf16.mxu0 0
      %617 = vmatpush1.bf16.msra.mxu0 0
      %618 = vmatprep.subr.bf16.mxu0 0
      %619 = vmatpush1.bf16.msra.mxu0 0
      %620 = vmatprep.subr.bf16.mxu0 0
      %621 = vmatpush1.bf16.msra.mxu0 0
      %622 = vmatprep.subr.bf16.mxu0 0
      %623 = vmatpush1.bf16.msra.mxu0 0
      %624 = vmatprep.subr.bf16.mxu0 0
      %625 = vmatpush1.bf16.msra.mxu0 0
      %626 = vmatprep.subr.bf16.mxu0 0
      %627 = vmatpush1.bf16.msra.mxu0 0
      %628 = vmatprep.mubr.bf16.mxu0 0
      %629 = vmatmul.mubr.bf16.gmra.mrb[0].mxu0 %v517
      %v630 = vpop.f32.mrb[0].mxu0
      %v631 = vadd.f32 %v546, %v630
      %v632 = vpop.f32.mrb[0].mxu0
      %v633 = vpop.f32.mrb[0].mxu0
      %v634 = vadd.f32 %v546, %v633
      %v635 = vpop.f32.mrb[0].mxu0
      %636 = vmatprep.mubr.bf16.mxu0 0
      %637 = vmatmul.mubr.bf16.gmra.mrb[0].mxu0 %v518
      %v638 = vpop.f32.mrb[0].mxu0
      %v639 = vadd.f32 %v546, %v638
      %v640 = vpop.f32.mrb[0].mxu0
      %v641 = vpop.f32.mrb[0].mxu0
      %v642 = vadd.f32 %v546, %v641
      %v643 = vpop.f32.mrb[0].mxu0
      %644 = vmatprep.mubr.bf16.mxu0 0
      %645 = vmatmul.mubr.bf16.gmra.mrb[0].mxu0 %v519
      %v646 = vpop.f32.mrb[0].mxu0
      %v647 = vadd.f32 %v546, %v646
      %v648 = vpop.f32.mrb[0].mxu0
      %v649 = vpop.f32.mrb[0].mxu0
      %v650 = vadd.f32 %v546, %v649
      %v651 = vpop.f32.mrb[0].mxu0
      %652 = vmatprep.mubr.bf16.mxu0 0
      %653 = vmatmul.mubr.bf16.gmra.mrb[0].mxu0 %v520
      %v654 = vpop.f32.mrb[0].mxu0
      %v655 = vadd.f32 %v546, %v654
      %v656 = vpop.f32.mrb[0].mxu0
      %v657 = vpop.f32.mrb[0].mxu0
      %v658 = vadd.f32 %v546, %v657
      %v659 = vpop.f32.mrb[0].mxu0
      %660 = vmatprep.mubr.bf16.mxu0 0
      %661 = vmatmul.mubr.bf16.gmra.mrb[0].mxu0 %v521
      %v662 = vpop.f32.mrb[0].mxu0
      %v663 = vadd.f32 %v546, %v662
      %v664 = vpop.f32.mrb[0].mxu0
      %v665 = vpop.f32.mrb[0].mxu0
      %v666 = vadd.f32 %v546, %v665
      %v667 = vpop.f32.mrb[0].mxu0
      %668 = vmatprep.mubr.bf16.mxu0 0
      %669 = vmatmul.mubr.bf16.gmra.mrb[0].mxu0 %v522
      %v670 = vpop.f32.mrb[0].mxu0
      %v671 = vadd.f32 %v546, %v670
      %v672 = vpop.f32.mrb[0].mxu0
      %v673 = vpop.f32.mrb[0].mxu0
      %v674 = vadd.f32 %v546, %v673
      %v675 = vpop.f32.mrb[0].mxu0
      %676 = vmatprep.mubr.bf16.mxu0 0
      %677 = vmatmul.mubr.bf16.gmra.mrb[0].mxu0 %v523
      %v678 = vpop.f32.mrb[0].mxu0
      %v679 = vadd.f32 %v546, %v678
      %v680 = vpop.f32.mrb[0].mxu0
      %v681 = vpop.f32.mrb[0].mxu0
      %v682 = vadd.f32 %v546, %v681
      %v683 = vpop.f32.mrb[0].mxu0
      %684 = vmatprep.mubr.bf16.mxu0 0
      %685 = vmatmul.mubr.bf16.gmra.mrb[0].mxu0 %v524
      %v686 = vpop.f32.mrb[0].mxu0
      %v687 = vadd.f32 %v546, %v686
      %v688 = vpop.f32.mrb[0].mxu0
      %v689 = vpop.f32.mrb[0].mxu0
      %v690 = vadd.f32 %v546, %v689
      %v691 = vpop.f32.mrb[0].mxu0
      %692 = vdwg.mxu0
      %v693 = vmax.f32 %v631, 0.0
      %v694 = vmax.f32 %v634, 0.0
      %v695 = vmax.f32 %v639, 0.0
      %v696 = vmax.f32 %v642, 0.0
      %v697 = vmax.f32 %v647, 0.0
      %v698 = vmax.f32 %v650, 0.0
      %v699 = vmax.f32 %v655, 0.0
      %v700 = vmax.f32 %v658, 0.0
      %v701 = vmax.f32 %v663, 0.0
      %v702 = vmax.f32 %v666, 0.0
      %v703 = vmax.f32 %v671, 0.0
      %v704 = vmax.f32 %v674, 0.0
      %v705 = vmax.f32 %v679, 0.0
      %v706 = vmax.f32 %v682, 0.0
      %v707 = vmax.f32 %v687, 0.0
      %v708 = vmax.f32 %v690, 0.0
      %v709 = vpack.c.bf16 %v694, %v693
      %v710 = vpack.c.bf16 %v696, %v695
      %v711 = vpack.c.bf16 %v698, %v697
      %v712 = vpack.c.bf16 %v700, %v699
      %v713 = vpack.c.bf16 %v702, %v701
      %v714 = vpack.c.bf16 %v704, %v703
      %v715 = vpack.c.bf16 %v706, %v705
      %v716 = vpack.c.bf16 %v708, %v707
      %v717 = vld [vmem:[%s5] sm:$0xf]
      %v718 = vld [vmem:[%s5 + $0x4] sm:$0xf]
      %v719 = vld [vmem:[%s5 + $0x8] sm:$0xf]
      %v720 = vld [vmem:[%s5 + $0xc] sm:$0xf]
      %v721 = vld [vmem:[%s5 + $0x10] sm:$0xf]
      %v722 = vld [vmem:[%s5 + $0x14] sm:$0xf]
      %v723 = vld [vmem:[%s5 + $0x18] sm:$0xf]
      %v724 = vld [vmem:[%s5 + $0x1c] sm:$0xf]
      %v725 = vld [vmem:[%s5 + $0x20] sm:$0xf]
      %v726 = vld [vmem:[%s5 + $0x24] sm:$0xf]
      %v727 = vld [vmem:[%s5 + $0x28] sm:$0xf]
      %v728 = vld [vmem:[%s5 + $0x2c] sm:$0xf]
      %v729 = vld [vmem:[%s5 + $0x30] sm:$0xf]
      %v730 = vld [vmem:[%s5 + $0x34] sm:$0xf]
      %v731 = vld [vmem:[%s5 + $0x38] sm:$0xf]
      %v732 = vld [vmem:[%s5 + $0x3c] sm:$0xf]
      %v749 = vunpack.c.l.b16 %v717
      %v750 = vunpack.c.l.b16 %v718
      %v751 = vunpack.c.l.b16 %v719
      %v752 = vunpack.c.l.b16 %v720
      %v753 = vunpack.c.l.b16 %v721
      %v754 = vunpack.c.l.b16 %v722
      %v755 = vunpack.c.l.b16 %v723
      %v756 = vunpack.c.l.b16 %v724
      %v757 = vunpack.c.l.b16 %v725
      %v758 = vunpack.c.l.b16 %v726
      %v759 = vunpack.c.l.b16 %v727
      %v760 = vunpack.c.l.b16 %v728
      %v761 = vunpack.c.l.b16 %v729
      %v762 = vunpack.c.l.b16 %v730
      %v763 = vunpack.c.l.b16 %v731
      %v764 = vunpack.c.l.b16 %v732
      %v765 = vpack.c.b16 %v750, %v749
      %v766 = vpack.c.b16 %v752, %v751
      %v767 = vpack.c.b16 %v754, %v753
      %v768 = vpack.c.b16 %v756, %v755
      %v769 = vpack.c.b16 %v758, %v757
      %v770 = vpack.c.b16 %v760, %v759
      %v771 = vpack.c.b16 %v762, %v761
      %v772 = vpack.c.b16 %v764, %v763
      %781 = vmatprep.subr.bf16.mxu0 0
      %782 = vmatpush1.bf16.msra.mxu0 %v765
      %783 = vmatprep.subr.bf16.mxu0 0
      %784 = vmatpush1.bf16.msra.mxu0 %v766
      %785 = vmatprep.subr.bf16.mxu0 0
      %786 = vmatpush1.bf16.msra.mxu0 %v767
      %787 = vmatprep.subr.bf16.mxu0 0
      %788 = vmatpush1.bf16.msra.mxu0 %v768
      %789 = vmatprep.subr.bf16.mxu0 0
      %790 = vmatpush1.bf16.msra.mxu0 %v769
      %791 = vmatprep.subr.bf16.mxu0 0
      %792 = vmatpush1.bf16.msra.mxu0 %v770
      %793 = vmatprep.subr.bf16.mxu0 0
      %794 = vmatpush1.bf16.msra.mxu0 %v771
      %795 = vmatprep.subr.bf16.mxu0 0
      %796 = vmatpush1.bf16.msra.mxu0 %v772
      %797 = vmatprep.subr.bf16.mxu0 0
      %798 = vmatpush1.bf16.msra.mxu0 0
      %799 = vmatprep.subr.bf16.mxu0 0
      %800 = vmatpush1.bf16.msra.mxu0 0
      %801 = vmatprep.subr.bf16.mxu0 0
      %802 = vmatpush1.bf16.msra.mxu0 0
      %803 = vmatprep.subr.bf16.mxu0 0
      %804 = vmatpush1.bf16.msra.mxu0 0
      %805 = vmatprep.subr.bf16.mxu0 0
      %806 = vmatpush1.bf16.msra.mxu0 0
      %807 = vmatprep.subr.bf16.mxu0 0
      %808 = vmatpush1.bf16.msra.mxu0 0
      %809 = vmatprep.subr.bf16.mxu0 0
      %810 = vmatpush1.bf16.msra.mxu0 0
      %811 = vmatprep.subr.bf16.mxu0 0
      %812 = vmatpush1.bf16.msra.mxu0 0
      %813 = vmatprep.mubr.bf16.mxu0 0
      %814 = vmatmul.mubr.bf16.gmra.mrb[0].mxu0 %v709
      %v815 = vpop.f32.mrb[0].mxu0
      %v816 = vadd.f32 0.0, %v815
      %v817 = vpop.f32.mrb[0].mxu0
      %v818 = vpop.f32.mrb[0].mxu0
      %v819 = vadd.f32 0.0, %v818
      %v820 = vpop.f32.mrb[0].mxu0
      %821 = vmatprep.mubr.bf16.mxu0 0
      %822 = vmatmul.mubr.bf16.gmra.mrb[0].mxu0 %v710
      %v823 = vpop.f32.mrb[0].mxu0
      %v824 = vadd.f32 0.0, %v823
      %v825 = vpop.f32.mrb[0].mxu0
      %v826 = vpop.f32.mrb[0].mxu0
      %v827 = vadd.f32 0.0, %v826
      %v828 = vpop.f32.mrb[0].mxu0
      %829 = vmatprep.mubr.bf16.mxu0 0
      %830 = vmatmul.mubr.bf16.gmra.mrb[0].mxu0 %v711
      %v831 = vpop.f32.mrb[0].mxu0
      %v832 = vadd.f32 0.0, %v831
      %v833 = vpop.f32.mrb[0].mxu0
      %v834 = vpop.f32.mrb[0].mxu0
      %v835 = vadd.f32 0.0, %v834
      %v836 = vpop.f32.mrb[0].mxu0
      %837 = vmatprep.mubr.bf16.mxu0 0
      %838 = vmatmul.mubr.bf16.gmra.mrb[0].mxu0 %v712
      %v839 = vpop.f32.mrb[0].mxu0
      %v840 = vadd.f32 0.0, %v839
      %v841 = vpop.f32.mrb[0].mxu0
      %v842 = vpop.f32.mrb[0].mxu0
      %v843 = vadd.f32 0.0, %v842
      %v844 = vpop.f32.mrb[0].mxu0
      %845 = vmatprep.mubr.bf16.mxu0 0
      %846 = vmatmul.mubr.bf16.gmra.mrb[0].mxu0 %v713
      %v847 = vpop.f32.mrb[0].mxu0
      %v848 = vadd.f32 0.0, %v847
      %v849 = vpop.f32.mrb[0].mxu0
      %v850 = vpop.f32.mrb[0].mxu0
      %v851 = vadd.f32 0.0, %v850
      %v852 = vpop.f32.mrb[0].mxu0
      %853 = vmatprep.mubr.bf16.mxu0 0
      %854 = vmatmul.mubr.bf16.gmra.mrb[0].mxu0 %v714
      %v855 = vpop.f32.mrb[0].mxu0
      %v856 = vadd.f32 0.0, %v855
      %v857 = vpop.f32.mrb[0].mxu0
      %v858 = vpop.f32.mrb[0].mxu0
      %v859 = vadd.f32 0.0, %v858
      %v860 = vpop.f32.mrb[0].mxu0
      %861 = vmatprep.mubr.bf16.mxu0 0
      %862 = vmatmul.mubr.bf16.gmra.mrb[0].mxu0 %v715
      %v863 = vpop.f32.mrb[0].mxu0
      %v864 = vadd.f32 0.0, %v863
      %v865 = vpop.f32.mrb[0].mxu0
      %v866 = vpop.f32.mrb[0].mxu0
      %v867 = vadd.f32 0.0, %v866
      %v868 = vpop.f32.mrb[0].mxu0
      %869 = vmatprep.mubr.bf16.mxu0 0
      %870 = vmatmul.mubr.bf16.gmra.mrb[0].mxu0 %v716
      %v871 = vpop.f32.mrb[0].mxu0
      %v872 = vadd.f32 0.0, %v871
      %v873 = vpop.f32.mrb[0].mxu0
      %v874 = vpop.f32.mrb[0].mxu0
      %v875 = vadd.f32 0.0, %v874
      %v876 = vpop.f32.mrb[0].mxu0
      %877 = vdwg.mxu0
      %v878 = vld [vmem:[%s6] sm:$0x1]
      %v880 = vlaneseq
      %v881 = vshrl.u32 %v880, 7
      %v882 = vsub.s32 0, %v881
      %v883 = vrot.slane %v878, %v882
      %v885 = vadd.f32 %v816, %v883
      %v886 = vadd.f32 %v819, %v883
      %v887 = vadd.f32 %v824, %v883
      %v888 = vadd.f32 %v827, %v883
      %v889 = vadd.f32 %v832, %v883
      %v890 = vadd.f32 %v835, %v883
      %v891 = vadd.f32 %v840, %v883
      %v892 = vadd.f32 %v843, %v883
      %v893 = vadd.f32 %v848, %v883
      %v894 = vadd.f32 %v851, %v883
      %v895 = vadd.f32 %v856, %v883
      %v896 = vadd.f32 %v859, %v883
      %v897 = vadd.f32 %v864, %v883
      %v898 = vadd.f32 %v867, %v883
      %v899 = vadd.f32 %v872, %v883
      %v900 = vadd.f32 %v875, %v883
      %vm901 = vcmask 31744
      %902 = vst.msk [vmem:[%s280] sm:$0xff] %vm901, %v885
      %903 = vst.msk [vmem:[%s280 + $0x8] sm:$0xff] %vm901, %v886
      %904 = vst.msk [vmem:[%s280 + $0x10] sm:$0xff] %vm901, %v887
      %905 = vst.msk [vmem:[%s280 + $0x18] sm:$0xff] %vm901, %v888
      %906 = vst.msk [vmem:[%s280 + $0x20] sm:$0xff] %vm901, %v889
      %907 = vst.msk [vmem:[%s280 + $0x28] sm:$0xff] %vm901, %v890
      %908 = vst.msk [vmem:[%s280 + $0x30] sm:$0xff] %vm901, %v891
      %909 = vst.msk [vmem:[%s280 + $0x38] sm:$0xff] %vm901, %v892
      %910 = vst.msk [vmem:[%s280 + $0x40] sm:$0xff] %vm901, %v893
      %911 = vst.msk [vmem:[%s280 + $0x48] sm:$0xff] %vm901, %v894
      %912 = vst.msk [vmem:[%s280 + $0x50] sm:$0xff] %vm901, %v895
      %913 = vst.msk [vmem:[%s280 + $0x58] sm:$0xff] %vm901, %v896
      %914 = vst.msk [vmem:[%s280 + $0x60] sm:$0xff] %vm901, %v897
      %915 = vst.msk [vmem:[%s280 + $0x68] sm:$0xff] %vm901, %v898
      %916 = vst.msk [vmem:[%s280 + $0x70] sm:$0xff] %vm901, %v899
      %917 = vst.msk [vmem:[%s280 + $0x78] sm:$0xff] %vm901, %v900
      %s918 = smul.u32 16, %s18
      %p919 = scmp.lt.s32.totalorder %s918, 31
      %s920 = scalar_select %p919, %s918, 31
      %s921 = smul.addr %s920, 8
      %s922 = scalar_lea.vmem %s7, %s921
      // Predicated region
      $region49: #{policy_forward.1} parent=47 // pred_check
        %p923 = pneg %p188
      $region50: #{policy_forward.1} parent=47 // pred_check_branch
        %925 = sbr.rel (%p923) target = $region52
      $region51: #{policy_forward.1} parent=47 // pred_region
        %s926 = smul.u32 16, %s18
      $region52: #{policy_forward.1} parent=47 // pred_fallthru
        _
    $region48: #{policy_forward.1} parent=5 // pred_fallthru
      _
    %p927 = scmp.le.s32.totalorder 2, %s13
    // Predicated region
    $region53: #{policy_forward.1} parent=5 // pred_check
      %p928 = pneg %p927
    $region54: #{policy_forward.1} parent=5 // pred_check_branch
      %930 = sbr.rel (%p928) target = $region56
    $region55: #{policy_forward.1} parent=5 // pred_region
      %s931 = ssub.s32 %s13, 2
      // Predicated region
      $region57: #{policy_forward.1} parent=55 // pred_check
        %p932 = pneg %p194
      $region58: #{policy_forward.1} parent=55 // pred_check_branch
        %934 = sbr.rel (%p932) target = $region60
      $region59: #{policy_forward.1} parent=55 // pred_region
        %s935 = smul.u32 16, %s19
        %p936 = scmp.lt.s32.totalorder %s935, 31
        %s937 = scalar_select %p936, %s935, 31
        %s938 = smul.addr %s937, 8
        %s939 = scalar_lea.vmem %s7, %s938
      $region60: #{policy_forward.1} parent=55 // pred_fallthru
        _
    $region56: #{policy_forward.1} parent=5 // pred_fallthru
      _
  $region6: #{policy_forward.1} parent=0 // loop_footer
    %s17 = sadd.s32 1, %s13
  $region7: #{policy_forward.1} parent=0 // loop_footer_branch
    %12 = sbr.rel target = $region3
  $region8: #{policy_forward.1} parent=0 // loop_exit
    _

</llo_original>
